<compile_context>
chip_gen: v6e
topology: v6e:2x2x1
jax: 0.10.0
libtpu: 0.0.40
codegen_flags: <defaults>
</compile_context>

<pallas_src>
import functools

import jax
import jax.numpy as jnp
from jax import lax
from jax.experimental import pallas as pl
from jax.experimental.pallas import tpu as pltpu


def _round_up(x, m):
    return ((x + m - 1) // m) * m


def rnn_seq_kernel(d_ref, h0_ref, w1d_ref, w1h_ref, b1_ref, w2_ref, b2_ref,
                   hid_out_ref, out_out_ref, h_scratch, *, t_blk):
    # d_ref:      [t_blk, Bp, Dp]   (this T-block of the input sequence)
    # h0_ref:     [Bp, Hp]          (initial hidden, resident)
    # w1d_ref:    [Dp, Hp]  w1h_ref: [Hp, Hp]  b1_ref: [1, Hp]
    # w2_ref:     [Hp, Op]  b2_ref:  [1, Op]
    # hid_out_ref:[t_blk, Bp, Hp]   out_out_ref: [t_blk, Bp, Op]
    # h_scratch:  [Bp, Hp]          (hidden carry across grid steps)
    tb = pl.program_id(0)

    @pl.when(tb == 0)
    def _():
        h_scratch[...] = h0_ref[...]

    w1d = w1d_ref[...]
    w1h = w1h_ref[...]
    b1 = b1_ref[...]
    w2 = w2_ref[...]
    b2 = b2_ref[...]

    def step(i, h_prev):
        x = d_ref[i]                                            # [Bp, Dp]
        hidden = (jnp.dot(x, w1d, preferred_element_type=jnp.float32)
                  + jnp.dot(h_prev, w1h, preferred_element_type=jnp.float32)
                  + b1)                                         # [Bp, Hp]
        hid_out_ref[i] = hidden.astype(hid_out_ref.dtype)
        out = jnp.dot(hidden, w2, preferred_element_type=jnp.float32) + b2
        out_out_ref[i] = out.astype(out_out_ref.dtype)
        return hidden

    h_final = lax.fori_loop(0, t_blk, step, h_scratch[...], unroll=True)
    h_scratch[...] = h_final


def prepare_params(w_i2h, b_i2h, w_h2o, b_h2o, data_size):
    """One-time parameter prep (hoisted out of the per-step path).

    PyTorch layouts:  w_i2h [H, D+H], b_i2h [H], w_h2o [O, H], b_h2o [O].
    Returns pre-transposed, zero-padded, lane-dense (x128) parameter arrays.
    """
    H = w_i2h.shape[0]
    O = w_h2o.shape[0]
    D = data_size
    Dp, Hp, Op = _round_up(D, 128), _round_up(H, 128), _round_up(O, 128)

    f32 = jnp.float32
    w1d = jnp.zeros((Dp, Hp), f32).at[:D, :H].set(w_i2h[:, :D].T.astype(f32))
    w1h = jnp.zeros((Hp, Hp), f32).at[:H, :H].set(w_i2h[:, D:].T.astype(f32))
    b1 = jnp.zeros((1, Hp), f32).at[0, :H].set(b_i2h.astype(f32))
    w2 = jnp.zeros((Hp, Op), f32).at[:H, :O].set(w_h2o.T.astype(f32))
    b2 = jnp.zeros((1, Op), f32).at[0, :O].set(b_h2o.astype(f32))

    params = (w1d, w1h, b1, w2, b2)
    dims = (D, H, O, Dp, Hp, Op)
    return params, dims


def rnn_forward_seq(data_seq, last_hidden, params, dims, *, t_blk_max=8):
    """Runs the RNN cell over a [T, B, D] sequence in ONE pallas_call.

    Semantically identical to calling RNN.forward T times, feeding `hidden`
    back in each step. Returns (hidden_seq [T,B,H], output_seq [T,B,O]).
    """
    w1d, w1h, b1, w2, b2 = params
    D, H, O, Dp, Hp, Op = dims
    T, B, _ = data_seq.shape

    Bp = _round_up(B, 8)
    t_blk = min(t_blk_max, T)
    T_pad = _round_up(T, t_blk)
    n_blocks = T_pad // t_blk

    f32 = jnp.float32
    d_pad = jnp.zeros((T_pad, Bp, Dp), f32).at[:T, :B, :D].set(
        data_seq.astype(f32))
    h0_pad = jnp.zeros((Bp, Hp), f32).at[:B, :H].set(last_hidden.astype(f32))

    flops = 2 * T_pad * Bp * (Dp * Hp + Hp * Hp + Hp * Op)
    bytes_accessed = 4 * (T_pad * Bp * (Dp + Hp + Op)
                          + Dp * Hp + Hp * Hp + Hp * Op + Hp + Op
                          + Bp * Hp)

    hid_seq, out_seq = pl.pallas_call(
        functools.partial(rnn_seq_kernel, t_blk=t_blk),
        out_shape=(
            jax.ShapeDtypeStruct((T_pad, Bp, Hp), f32),
            jax.ShapeDtypeStruct((T_pad, Bp, Op), f32),
        ),
        grid=(n_blocks,),
        in_specs=[
            pl.BlockSpec((t_blk, Bp, Dp), lambda tb: (tb, 0, 0)),  # data block
            pl.BlockSpec((Bp, Hp), lambda tb: (0, 0)),             # h0 (resident)
            pl.BlockSpec((Dp, Hp), lambda tb: (0, 0)),             # W1d
            pl.BlockSpec((Hp, Hp), lambda tb: (0, 0)),             # W1h
            pl.BlockSpec((1, Hp), lambda tb: (0, 0)),              # b1
            pl.BlockSpec((Hp, Op), lambda tb: (0, 0)),             # W2
            pl.BlockSpec((1, Op), lambda tb: (0, 0)),              # b2
        ],
        out_specs=(
            pl.BlockSpec((t_blk, Bp, Hp), lambda tb: (tb, 0, 0)),
            pl.BlockSpec((t_blk, Bp, Op), lambda tb: (tb, 0, 0)),
        ),
        scratch_shapes=[pltpu.VMEM((Bp, Hp), f32)],
        compiler_params=pltpu.CompilerParams(
            dimension_semantics=("arbitrary",)),  # sequential recurrence
        cost_estimate=pl.CostEstimate(
            flops=flops, transcendentals=0, bytes_accessed=bytes_accessed),
    )(d_pad, h0_pad, w1d, w1h, b1, w2, b2)

    return hid_seq[:T, :B, :H], out_seq[:T, :B, :O]


def rnn_forward(data, last_hidden, params, dims):
    """Single-step forward matching the PyTorch module: returns (hidden, output)."""
    hid_seq, out_seq = rnn_forward_seq(data[None], last_hidden, params, dims)
    return hid_seq[0], out_seq[0]


if __name__ == "__main__":
    # Shapes consistent with the tutorial: RNN(50, 20, 10), batch 10, 6 steps.
    batch_size = 10
    data_size = 50
    hidden_size = 20
    output_size = 10
    timesteps = 6

    key = jax.random.PRNGKey(0)
    k_data, k_w1, k_b1, k_w2, k_b2 = jax.random.split(key, 5)

    data_seq = jax.random.normal(
        k_data, (timesteps, batch_size, data_size), dtype=jnp.float32)
    last_hidden = jnp.zeros((batch_size, hidden_size), dtype=jnp.float32)

    # nn.Linear layouts: W [out, in], b [out].
    input_size = data_size + hidden_size
    w_i2h = jax.random.normal(k_w1, (hidden_size, input_size), jnp.float32) * 0.1
    b_i2h = jax.random.normal(k_b1, (hidden_size,), jnp.float32) * 0.1
    w_h2o = jax.random.normal(k_w2, (output_size, hidden_size), jnp.float32) * 0.1
    b_h2o = jax.random.normal(k_b2, (output_size,), jnp.float32) * 0.1

    # One-time parameter prep (transpose/split/pad), hoisted off the step path.
    params, dims = prepare_params(w_i2h, b_i2h, w_h2o, b_h2o, data_size)

    # Fused multi-step run (entire recurrence in one pallas_call).
    hid_seq, out_seq = rnn_forward_seq(data_seq, last_hidden, params, dims)
    jax.block_until_ready((hid_seq, out_seq))

    # Single-step path, matching the module's forward(data, last_hidden).
    hidden1, output1 = rnn_forward(data_seq[0], last_hidden, params, dims)
    jax.block_until_ready((hidden1, output1))

    # Plain-JAX reference (same semantics as the PyTorch module in a loop).
    h = last_hidden
    ref_hids, ref_outs = [], []
    for t in range(timesteps):
        x = jnp.concatenate([data_seq[t], h], axis=1)
        h = jnp.dot(x, w_i2h.T, preferred_element_type=jnp.float32) + b_i2h
        o = jnp.dot(h, w_h2o.T, preferred_element_type=jnp.float32) + b_h2o
        ref_hids.append(h)
        ref_outs.append(o)
    ref_hid_seq = jnp.stack(ref_hids)
    ref_out_seq = jnp.stack(ref_outs)

    assert hid_seq.shape == (timesteps, batch_size, hidden_size)
    assert out_seq.shape == (timesteps, batch_size, output_size)
    assert jnp.allclose(hid_seq, ref_hid_seq, atol=1e-4, rtol=1e-4)
    assert jnp.allclose(out_seq, ref_out_seq, atol=1e-4, rtol=1e-4)
    assert jnp.allclose(hidden1, ref_hid_seq[0], atol=1e-4, rtol=1e-4)
    assert jnp.allclose(output1, ref_out_seq[0], atol=1e-4, rtol=1e-4)

    print("KERNEL_OK")
</pallas_src>

<mosaic_0001>
module attributes {stable_mosaic.version = 11 : i64} {
  func.func @rnn_seq_kernel(%arg0: i32, %arg1: memref<6x16x128xf32, #tpu.memory_space<vmem>>, %arg2: memref<16x128xf32, #tpu.memory_space<vmem>>, %arg3: memref<128x128xf32, #tpu.memory_space<vmem>>, %arg4: memref<128x128xf32, #tpu.memory_space<vmem>>, %arg5: memref<1x128xf32, #tpu.memory_space<vmem>>, %arg6: memref<128x128xf32, #tpu.memory_space<vmem>>, %arg7: memref<1x128xf32, #tpu.memory_space<vmem>>, %arg8: memref<6x16x128xf32, #tpu.memory_space<vmem>>, %arg9: memref<6x16x128xf32, #tpu.memory_space<vmem>>, %arg10: memref<16x128xf32, #tpu.memory_space<vmem>>) attributes {dimension_semantics = [#tpu.dimension_semantics<arbitrary>], iteration_bounds = array<i64: 1>, scalar_prefetch = 0 : i64, scratch_operands = 1 : i64, tpu.core_type = #tpu.core_type<tc>, window_params = [{transform_indices = @transform_0, window_bounds = array<i64: 6, 16, 128>}, {pipeline_mode = #tpu.pipeline_mode<synchronous>, transform_indices = @transform_1, window_bounds = array<i64: 16, 128>}, {pipeline_mode = #tpu.pipeline_mode<synchronous>, transform_indices = @transform_2, window_bounds = array<i64: 128, 128>}, {pipeline_mode = #tpu.pipeline_mode<synchronous>, transform_indices = @transform_3, window_bounds = array<i64: 128, 128>}, {pipeline_mode = #tpu.pipeline_mode<synchronous>, transform_indices = @transform_4, window_bounds = array<i64: 1, 128>}, {pipeline_mode = #tpu.pipeline_mode<synchronous>, transform_indices = @transform_5, window_bounds = array<i64: 128, 128>}, {pipeline_mode = #tpu.pipeline_mode<synchronous>, transform_indices = @transform_6, window_bounds = array<i64: 1, 128>}, {transform_indices = @transform_7, window_bounds = array<i64: 6, 16, 128>}, {transform_indices = @transform_8, window_bounds = array<i64: 6, 16, 128>}]} {
    %c0_i32 = arith.constant 0 : i32
    %0 = arith.cmpi eq, %arg0, %c0_i32 : i32
    %1 = arith.extui %0 : i1 to i32
    %c0_i32_0 = arith.constant 0 : i32
    %2 = arith.cmpi ne, %1, %c0_i32_0 : i32
    scf.if %2 {
      %c0_68 = arith.constant 0 : index
      %c0_69 = arith.constant 0 : index
      %124 = vector.load %arg2[%c0_68, %c0_69] : memref<16x128xf32, #tpu.memory_space<vmem>>, vector<16x128xf32>
      %c0_70 = arith.constant 0 : index
      %c0_71 = arith.constant 0 : index
      %125 = vector.load %arg10[%c0_70, %c0_71] : memref<16x128xf32, #tpu.memory_space<vmem>>, vector<16x128xf32>
      tpu.vector_store %arg10[%c0_70, %c0_71], %124 {strides = array<i32>} : memref<16x128xf32, #tpu.memory_space<vmem>>, vector<16x128xf32>,
    } else {
    }
    %c0 = arith.constant 0 : index
    %c0_1 = arith.constant 0 : index
    %3 = vector.load %arg3[%c0, %c0_1] : memref<128x128xf32, #tpu.memory_space<vmem>>, vector<128x128xf32>
    %c0_2 = arith.constant 0 : index
    %c0_3 = arith.constant 0 : index
    %4 = vector.load %arg4[%c0_2, %c0_3] : memref<128x128xf32, #tpu.memory_space<vmem>>, vector<128x128xf32>
    %c0_4 = arith.constant 0 : index
    %c0_5 = arith.constant 0 : index
    %5 = vector.load %arg5[%c0_4, %c0_5] : memref<1x128xf32, #tpu.memory_space<vmem>>, vector<1x128xf32>
    %c0_6 = arith.constant 0 : index
    %c0_7 = arith.constant 0 : index
    %6 = vector.load %arg6[%c0_6, %c0_7] : memref<128x128xf32, #tpu.memory_space<vmem>>, vector<128x128xf32>
    %c0_8 = arith.constant 0 : index
    %c0_9 = arith.constant 0 : index
    %7 = vector.load %arg7[%c0_8, %c0_9] : memref<1x128xf32, #tpu.memory_space<vmem>>, vector<1x128xf32>
    %c0_10 = arith.constant 0 : index
    %c0_11 = arith.constant 0 : index
    %8 = vector.load %arg10[%c0_10, %c0_11] : memref<16x128xf32, #tpu.memory_space<vmem>>, vector<16x128xf32>
    %c0_i32_12 = arith.constant 0 : i32
    %9 = arith.index_cast %c0_i32_12 : i32 to index
    %c0_13 = arith.constant 0 : index
    %c0_14 = arith.constant 0 : index
    %10 = vector.load %arg1[%9, %c0_13, %c0_14] : memref<6x16x128xf32, #tpu.memory_space<vmem>>, vector<1x16x128xf32>
    %11 = vector.shape_cast %10 : vector<1x16x128xf32> to vector<16x128xf32>
    %cst = arith.constant dense<0.000000e+00> : vector<16x128xf32>
    %12 = tpu.matmul %11, %3, %cst {dimension_numbers = #tpu.dot_dimension_numbers<[1], [0], [0], [1], [0, 0, 1, 1], [], []>} : vector<16x128xf32>, vector<128x128xf32>, vector<16x128xf32> -> vector<16x128xf32>
    %cst_15 = arith.constant dense<0.000000e+00> : vector<16x128xf32>
    %13 = tpu.matmul %8, %4, %cst_15 {dimension_numbers = #tpu.dot_dimension_numbers<[1], [0], [0], [1], [0, 0, 1, 1], [], []>} : vector<16x128xf32>, vector<128x128xf32>, vector<16x128xf32> -> vector<16x128xf32>
    %14 = arith.addf %12, %13 : vector<16x128xf32>
    %15 = vector.broadcast %5 : vector<1x128xf32> to vector<16x128xf32>
    %16 = arith.addf %14, %15 : vector<16x128xf32>
    %17 = arith.index_cast %c0_i32_12 : i32 to index
    %c0_16 = arith.constant 0 : index
    %c0_17 = arith.constant 0 : index
    %18 = vector.load %arg8[%17, %c0_16, %c0_17] : memref<6x16x128xf32, #tpu.memory_space<vmem>>, vector<1x16x128xf32>
    %19 = vector.shape_cast %18 : vector<1x16x128xf32> to vector<16x128xf32>
    %20 = vector.shape_cast %16 : vector<16x128xf32> to vector<1x16x128xf32>
    tpu.vector_store %arg8[%17, %c0_16, %c0_17], %20 {strides = array<i32>} : memref<6x16x128xf32, #tpu.memory_space<vmem>>, vector<1x16x128xf32>,
    %cst_18 = arith.constant dense<0.000000e+00> : vector<16x128xf32>
    %21 = tpu.matmul %16, %6, %cst_18 {dimension_numbers = #tpu.dot_dimension_numbers<[1], [0], [0], [1], [0, 0, 1, 1], [], []>} : vector<16x128xf32>, vector<128x128xf32>, vector<16x128xf32> -> vector<16x128xf32>
    %22 = vector.broadcast %7 : vector<1x128xf32> to vector<16x128xf32>
    %23 = arith.addf %21, %22 : vector<16x128xf32>
    %24 = arith.index_cast %c0_i32_12 : i32 to index
    %c0_19 = arith.constant 0 : index
    %c0_20 = arith.constant 0 : index
    %25 = vector.load %arg9[%24, %c0_19, %c0_20] : memref<6x16x128xf32, #tpu.memory_space<vmem>>, vector<1x16x128xf32>
    %26 = vector.shape_cast %25 : vector<1x16x128xf32> to vector<16x128xf32>
    %27 = vector.shape_cast %23 : vector<16x128xf32> to vector<1x16x128xf32>
    tpu.vector_store %arg9[%24, %c0_19, %c0_20], %27 {strides = array<i32>} : memref<6x16x128xf32, #tpu.memory_space<vmem>>, vector<1x16x128xf32>,
    %c1_i32 = arith.constant 1 : i32
    %28 = arith.index_cast %c1_i32 : i32 to index
    %c0_21 = arith.constant 0 : index
    %c0_22 = arith.constant 0 : index
    %29 = vector.load %arg1[%28, %c0_21, %c0_22] : memref<6x16x128xf32, #tpu.memory_space<vmem>>, vector<1x16x128xf32>
    %30 = vector.shape_cast %29 : vector<1x16x128xf32> to vector<16x128xf32>
    %cst_23 = arith.constant dense<0.000000e+00> : vector<16x128xf32>
    %31 = tpu.matmul %30, %3, %cst_23 {dimension_numbers = #tpu.dot_dimension_numbers<[1], [0], [0], [1], [0, 0, 1, 1], [], []>} : vector<16x128xf32>, vector<128x128xf32>, vector<16x128xf32> -> vector<16x128xf32>
    %cst_24 = arith.constant dense<0.000000e+00> : vector<16x128xf32>
    %32 = tpu.matmul %16, %4, %cst_24 {dimension_numbers = #tpu.dot_dimension_numbers<[1], [0], [0], [1], [0, 0, 1, 1], [], []>} : vector<16x128xf32>, vector<128x128xf32>, vector<16x128xf32> -> vector<16x128xf32>
    %33 = arith.addf %31, %32 : vector<16x128xf32>
    %34 = vector.broadcast %5 : vector<1x128xf32> to vector<16x128xf32>
    %35 = arith.addf %33, %34 : vector<16x128xf32>
    %36 = arith.index_cast %c1_i32 : i32 to index
    %c0_25 = arith.constant 0 : index
    %c0_26 = arith.constant 0 : index
    %37 = vector.load %arg8[%36, %c0_25, %c0_26] : memref<6x16x128xf32, #tpu.memory_space<vmem>>, vector<1x16x128xf32>
    %38 = vector.shape_cast %37 : vector<1x16x128xf32> to vector<16x128xf32>
    %39 = vector.shape_cast %35 : vector<16x128xf32> to vector<1x16x128xf32>
    tpu.vector_store %arg8[%36, %c0_25, %c0_26], %39 {strides = array<i32>} : memref<6x16x128xf32, #tpu.memory_space<vmem>>, vector<1x16x128xf32>,
    %cst_27 = arith.constant dense<0.000000e+00> : vector<16x128xf32>
    %40 = tpu.matmul %35, %6, %cst_27 {dimension_numbers = #tpu.dot_dimension_numbers<[1], [0], [0], [1], [0, 0, 1, 1], [], []>} : vector<16x128xf32>, vector<128x128xf32>, vector<16x128xf32> -> vector<16x128xf32>
    %41 = vector.broadcast %7 : vector<1x128xf32> to vector<16x128xf32>
    %42 = arith.addf %40, %41 : vector<16x128xf32>
    %43 = arith.index_cast %c1_i32 : i32 to index
    %c0_28 = arith.constant 0 : index
    %c0_29 = arith.constant 0 : index
    %44 = vector.load %arg9[%43, %c0_28, %c0_29] : memref<6x16x128xf32, #tpu.memory_space<vmem>>, vector<1x16x128xf32>
    %45 = vector.shape_cast %44 : vector<1x16x128xf32> to vector<16x128xf32>
    %46 = vector.shape_cast %42 : vector<16x128xf32> to vector<1x16x128xf32>
    tpu.vector_store %arg9[%43, %c0_28, %c0_29], %46 {strides = array<i32>} : memref<6x16x128xf32, #tpu.memory_space<vmem>>, vector<1x16x128xf32>,
    %c2_i32 = arith.constant 2 : i32
    %47 = arith.index_cast %c2_i32 : i32 to index
    %c0_30 = arith.constant 0 : index
    %c0_31 = arith.constant 0 : index
    %48 = vector.load %arg1[%47, %c0_30, %c0_31] : memref<6x16x128xf32, #tpu.memory_space<vmem>>, vector<1x16x128xf32>
    %49 = vector.shape_cast %48 : vector<1x16x128xf32> to vector<16x128xf32>
    %cst_32 = arith.constant dense<0.000000e+00> : vector<16x128xf32>
    %50 = tpu.matmul %49, %3, %cst_32 {dimension_numbers = #tpu.dot_dimension_numbers<[1], [0], [0], [1], [0, 0, 1, 1], [], []>} : vector<16x128xf32>, vector<128x128xf32>, vector<16x128xf32> -> vector<16x128xf32>
    %cst_33 = arith.constant dense<0.000000e+00> : vector<16x128xf32>
    %51 = tpu.matmul %35, %4, %cst_33 {dimension_numbers = #tpu.dot_dimension_numbers<[1], [0], [0], [1], [0, 0, 1, 1], [], []>} : vector<16x128xf32>, vector<128x128xf32>, vector<16x128xf32> -> vector<16x128xf32>
    %52 = arith.addf %50, %51 : vector<16x128xf32>
    %53 = vector.broadcast %5 : vector<1x128xf32> to vector<16x128xf32>
    %54 = arith.addf %52, %53 : vector<16x128xf32>
    %55 = arith.index_cast %c2_i32 : i32 to index
    %c0_34 = arith.constant 0 : index
    %c0_35 = arith.constant 0 : index
    %56 = vector.load %arg8[%55, %c0_34, %c0_35] : memref<6x16x128xf32, #tpu.memory_space<vmem>>, vector<1x16x128xf32>
    %57 = vector.shape_cast %56 : vector<1x16x128xf32> to vector<16x128xf32>
    %58 = vector.shape_cast %54 : vector<16x128xf32> to vector<1x16x128xf32>
    tpu.vector_store %arg8[%55, %c0_34, %c0_35], %58 {strides = array<i32>} : memref<6x16x128xf32, #tpu.memory_space<vmem>>, vector<1x16x128xf32>,
    %cst_36 = arith.constant dense<0.000000e+00> : vector<16x128xf32>
    %59 = tpu.matmul %54, %6, %cst_36 {dimension_numbers = #tpu.dot_dimension_numbers<[1], [0], [0], [1], [0, 0, 1, 1], [], []>} : vector<16x128xf32>, vector<128x128xf32>, vector<16x128xf32> -> vector<16x128xf32>
    %60 = vector.broadcast %7 : vector<1x128xf32> to vector<16x128xf32>
    %61 = arith.addf %59, %60 : vector<16x128xf32>
    %62 = arith.index_cast %c2_i32 : i32 to index
    %c0_37 = arith.constant 0 : index
    %c0_38 = arith.constant 0 : index
    %63 = vector.load %arg9[%62, %c0_37, %c0_38] : memref<6x16x128xf32, #tpu.memory_space<vmem>>, vector<1x16x128xf32>
    %64 = vector.shape_cast %63 : vector<1x16x128xf32> to vector<16x128xf32>
    %65 = vector.shape_cast %61 : vector<16x128xf32> to vector<1x16x128xf32>
    tpu.vector_store %arg9[%62, %c0_37, %c0_38], %65 {strides = array<i32>} : memref<6x16x128xf32, #tpu.memory_space<vmem>>, vector<1x16x128xf32>,
    %c3_i32 = arith.constant 3 : i32
    %66 = arith.index_cast %c3_i32 : i32 to index
    %c0_39 = arith.constant 0 : index
    %c0_40 = arith.constant 0 : index
    %67 = vector.load %arg1[%66, %c0_39, %c0_40] : memref<6x16x128xf32, #tpu.memory_space<vmem>>, vector<1x16x128xf32>
    %68 = vector.shape_cast %67 : vector<1x16x128xf32> to vector<16x128xf32>
    %cst_41 = arith.constant dense<0.000000e+00> : vector<16x128xf32>
    %69 = tpu.matmul %68, %3, %cst_41 {dimension_numbers = #tpu.dot_dimension_numbers<[1], [0], [0], [1], [0, 0, 1, 1], [], []>} : vector<16x128xf32>, vector<128x128xf32>, vector<16x128xf32> -> vector<16x128xf32>
    %cst_42 = arith.constant dense<0.000000e+00> : vector<16x128xf32>
    %70 = tpu.matmul %54, %4, %cst_42 {dimension_numbers = #tpu.dot_dimension_numbers<[1], [0], [0], [1], [0, 0, 1, 1], [], []>} : vector<16x128xf32>, vector<128x128xf32>, vector<16x128xf32> -> vector<16x128xf32>
    %71 = arith.addf %69, %70 : vector<16x128xf32>
    %72 = vector.broadcast %5 : vector<1x128xf32> to vector<16x128xf32>
    %73 = arith.addf %71, %72 : vector<16x128xf32>
    %74 = arith.index_cast %c3_i32 : i32 to index
    %c0_43 = arith.constant 0 : index
    %c0_44 = arith.constant 0 : index
    %75 = vector.load %arg8[%74, %c0_43, %c0_44] : memref<6x16x128xf32, #tpu.memory_space<vmem>>, vector<1x16x128xf32>
    %76 = vector.shape_cast %75 : vector<1x16x128xf32> to vector<16x128xf32>
    %77 = vector.shape_cast %73 : vector<16x128xf32> to vector<1x16x128xf32>
    tpu.vector_store %arg8[%74, %c0_43, %c0_44], %77 {strides = array<i32>} : memref<6x16x128xf32, #tpu.memory_space<vmem>>, vector<1x16x128xf32>,
    %cst_45 = arith.constant dense<0.000000e+00> : vector<16x128xf32>
    %78 = tpu.matmul %73, %6, %cst_45 {dimension_numbers = #tpu.dot_dimension_numbers<[1], [0], [0], [1], [0, 0, 1, 1], [], []>} : vector<16x128xf32>, vector<128x128xf32>, vector<16x128xf32> -> vector<16x128xf32>
    %79 = vector.broadcast %7 : vector<1x128xf32> to vector<16x128xf32>
    %80 = arith.addf %78, %79 : vector<16x128xf32>
    %81 = arith.index_cast %c3_i32 : i32 to index
    %c0_46 = arith.constant 0 : index
    %c0_47 = arith.constant 0 : index
    %82 = vector.load %arg9[%81, %c0_46, %c0_47] : memref<6x16x128xf32, #tpu.memory_space<vmem>>, vector<1x16x128xf32>
    %83 = vector.shape_cast %82 : vector<1x16x128xf32> to vector<16x128xf32>
    %84 = vector.shape_cast %80 : vector<16x128xf32> to vector<1x16x128xf32>
    tpu.vector_store %arg9[%81, %c0_46, %c0_47], %84 {strides = array<i32>} : memref<6x16x128xf32, #tpu.memory_space<vmem>>, vector<1x16x128xf32>,
    %c4_i32 = arith.constant 4 : i32
    %85 = arith.index_cast %c4_i32 : i32 to index
    %c0_48 = arith.constant 0 : index
    %c0_49 = arith.constant 0 : index
    %86 = vector.load %arg1[%85, %c0_48, %c0_49] : memref<6x16x128xf32, #tpu.memory_space<vmem>>, vector<1x16x128xf32>
    %87 = vector.shape_cast %86 : vector<1x16x128xf32> to vector<16x128xf32>
    %cst_50 = arith.constant dense<0.000000e+00> : vector<16x128xf32>
    %88 = tpu.matmul %87, %3, %cst_50 {dimension_numbers = #tpu.dot_dimension_numbers<[1], [0], [0], [1], [0, 0, 1, 1], [], []>} : vector<16x128xf32>, vector<128x128xf32>, vector<16x128xf32> -> vector<16x128xf32>
    %cst_51 = arith.constant dense<0.000000e+00> : vector<16x128xf32>
    %89 = tpu.matmul %73, %4, %cst_51 {dimension_numbers = #tpu.dot_dimension_numbers<[1], [0], [0], [1], [0, 0, 1, 1], [], []>} : vector<16x128xf32>, vector<128x128xf32>, vector<16x128xf32> -> vector<16x128xf32>
    %90 = arith.addf %88, %89 : vector<16x128xf32>
    %91 = vector.broadcast %5 : vector<1x128xf32> to vector<16x128xf32>
    %92 = arith.addf %90, %91 : vector<16x128xf32>
    %93 = arith.index_cast %c4_i32 : i32 to index
    %c0_52 = arith.constant 0 : index
    %c0_53 = arith.constant 0 : index
    %94 = vector.load %arg8[%93, %c0_52, %c0_53] : memref<6x16x128xf32, #tpu.memory_space<vmem>>, vector<1x16x128xf32>
    %95 = vector.shape_cast %94 : vector<1x16x128xf32> to vector<16x128xf32>
    %96 = vector.shape_cast %92 : vector<16x128xf32> to vector<1x16x128xf32>
    tpu.vector_store %arg8[%93, %c0_52, %c0_53], %96 {strides = array<i32>} : memref<6x16x128xf32, #tpu.memory_space<vmem>>, vector<1x16x128xf32>,
    %cst_54 = arith.constant dense<0.000000e+00> : vector<16x128xf32>
    %97 = tpu.matmul %92, %6, %cst_54 {dimension_numbers = #tpu.dot_dimension_numbers<[1], [0], [0], [1], [0, 0, 1, 1], [], []>} : vector<16x128xf32>, vector<128x128xf32>, vector<16x128xf32> -> vector<16x128xf32>
    %98 = vector.broadcast %7 : vector<1x128xf32> to vector<16x128xf32>
    %99 = arith.addf %97, %98 : vector<16x128xf32>
    %100 = arith.index_cast %c4_i32 : i32 to index
    %c0_55 = arith.constant 0 : index
    %c0_56 = arith.constant 0 : index
    %101 = vector.load %arg9[%100, %c0_55, %c0_56] : memref<6x16x128xf32, #tpu.memory_space<vmem>>, vector<1x16x128xf32>
    %102 = vector.shape_cast %101 : vector<1x16x128xf32> to vector<16x128xf32>
    %103 = vector.shape_cast %99 : vector<16x128xf32> to vector<1x16x128xf32>
    tpu.vector_store %arg9[%100, %c0_55, %c0_56], %103 {strides = array<i32>} : memref<6x16x128xf32, #tpu.memory_space<vmem>>, vector<1x16x128xf32>,
    %c5_i32 = arith.constant 5 : i32
    %104 = arith.index_cast %c5_i32 : i32 to index
    %c0_57 = arith.constant 0 : index
    %c0_58 = arith.constant 0 : index
    %105 = vector.load %arg1[%104, %c0_57, %c0_58] : memref<6x16x128xf32, #tpu.memory_space<vmem>>, vector<1x16x128xf32>
    %106 = vector.shape_cast %105 : vector<1x16x128xf32> to vector<16x128xf32>
    %cst_59 = arith.constant dense<0.000000e+00> : vector<16x128xf32>
    %107 = tpu.matmul %106, %3, %cst_59 {dimension_numbers = #tpu.dot_dimension_numbers<[1], [0], [0], [1], [0, 0, 1, 1], [], []>} : vector<16x128xf32>, vector<128x128xf32>, vector<16x128xf32> -> vector<16x128xf32>
    %cst_60 = arith.constant dense<0.000000e+00> : vector<16x128xf32>
    %108 = tpu.matmul %92, %4, %cst_60 {dimension_numbers = #tpu.dot_dimension_numbers<[1], [0], [0], [1], [0, 0, 1, 1], [], []>} : vector<16x128xf32>, vector<128x128xf32>, vector<16x128xf32> -> vector<16x128xf32>
    %109 = arith.addf %107, %108 : vector<16x128xf32>
    %110 = vector.broadcast %5 : vector<1x128xf32> to vector<16x128xf32>
    %111 = arith.addf %109, %110 : vector<16x128xf32>
    %112 = arith.index_cast %c5_i32 : i32 to index
    %c0_61 = arith.constant 0 : index
    %c0_62 = arith.constant 0 : index
    %113 = vector.load %arg8[%112, %c0_61, %c0_62] : memref<6x16x128xf32, #tpu.memory_space<vmem>>, vector<1x16x128xf32>
    %114 = vector.shape_cast %113 : vector<1x16x128xf32> to vector<16x128xf32>
    %115 = vector.shape_cast %111 : vector<16x128xf32> to vector<1x16x128xf32>
    tpu.vector_store %arg8[%112, %c0_61, %c0_62], %115 {strides = array<i32>} : memref<6x16x128xf32, #tpu.memory_space<vmem>>, vector<1x16x128xf32>,
    %cst_63 = arith.constant dense<0.000000e+00> : vector<16x128xf32>
    %116 = tpu.matmul %111, %6, %cst_63 {dimension_numbers = #tpu.dot_dimension_numbers<[1], [0], [0], [1], [0, 0, 1, 1], [], []>} : vector<16x128xf32>, vector<128x128xf32>, vector<16x128xf32> -> vector<16x128xf32>
    %117 = vector.broadcast %7 : vector<1x128xf32> to vector<16x128xf32>
    %118 = arith.addf %116, %117 : vector<16x128xf32>
    %119 = arith.index_cast %c5_i32 : i32 to index
    %c0_64 = arith.constant 0 : index
    %c0_65 = arith.constant 0 : index
    %120 = vector.load %arg9[%119, %c0_64, %c0_65] : memref<6x16x128xf32, #tpu.memory_space<vmem>>, vector<1x16x128xf32>
    %121 = vector.shape_cast %120 : vector<1x16x128xf32> to vector<16x128xf32>
    %122 = vector.shape_cast %118 : vector<16x128xf32> to vector<1x16x128xf32>
    tpu.vector_store %arg9[%119, %c0_64, %c0_65], %122 {strides = array<i32>} : memref<6x16x128xf32, #tpu.memory_space<vmem>>, vector<1x16x128xf32>,
    %c6_i32 = arith.constant 6 : i32
    %c0_66 = arith.constant 0 : index
    %c0_67 = arith.constant 0 : index
    %123 = vector.load %arg10[%c0_66, %c0_67] : memref<16x128xf32, #tpu.memory_space<vmem>>, vector<16x128xf32>
    tpu.vector_store %arg10[%c0_66, %c0_67], %111 {strides = array<i32>} : memref<16x128xf32, #tpu.memory_space<vmem>>, vector<16x128xf32>,
    return
  }
  func.func @transform_0(%arg0: i32) -> (i32, i32, i32) {
    %c0_i32 = arith.constant 0 : i32
    %c0_i32_0 = arith.constant 0 : i32
    %c0_i32_1 = arith.constant 0 : i32
    return %arg0, %c0_i32, %c0_i32_0 : i32, i32, i32
  }
  func.func @transform_1(%arg0: i32) -> (i32, i32) {
    %c0_i32 = arith.constant 0 : i32
    %c0_i32_0 = arith.constant 0 : i32
    %c0_i32_1 = arith.constant 0 : i32
    return %c0_i32, %c0_i32_0 : i32, i32
  }
  func.func @transform_2(%arg0: i32) -> (i32, i32) {
    %c0_i32 = arith.constant 0 : i32
    %c0_i32_0 = arith.constant 0 : i32
    %c0_i32_1 = arith.constant 0 : i32
    return %c0_i32, %c0_i32_0 : i32, i32
  }
  func.func @transform_3(%arg0: i32) -> (i32, i32) {
    %c0_i32 = arith.constant 0 : i32
    %c0_i32_0 = arith.constant 0 : i32
    %c0_i32_1 = arith.constant 0 : i32
    return %c0_i32, %c0_i32_0 : i32, i32
  }
  func.func @transform_4(%arg0: i32) -> (i32, i32) {
    %c0_i32 = arith.constant 0 : i32
    %c0_i32_0 = arith.constant 0 : i32
    %c0_i32_1 = arith.constant 0 : i32
    return %c0_i32, %c0_i32_0 : i32, i32
  }
  func.func @transform_5(%arg0: i32) -> (i32, i32) {
    %c0_i32 = arith.constant 0 : i32
    %c0_i32_0 = arith.constant 0 : i32
    %c0_i32_1 = arith.constant 0 : i32
    return %c0_i32, %c0_i32_0 : i32, i32
  }
  func.func @transform_6(%arg0: i32) -> (i32, i32) {
    %c0_i32 = arith.constant 0 : i32
    %c0_i32_0 = arith.constant 0 : i32
    %c0_i32_1 = arith.constant 0 : i32
    return %c0_i32, %c0_i32_0 : i32, i32
  }
  func.func @transform_7(%arg0: i32) -> (i32, i32, i32) {
    %c0_i32 = arith.constant 0 : i32
    %c0_i32_0 = arith.constant 0 : i32
    %c0_i32_1 = arith.constant 0 : i32
    return %arg0, %c0_i32, %c0_i32_0 : i32, i32, i32
  }
  func.func @transform_8(%arg0: i32) -> (i32, i32, i32) {
    %c0_i32 = arith.constant 0 : i32
    %c0_i32_0 = arith.constant 0 : i32
    %c0_i32_1 = arith.constant 0 : i32
    return %arg0, %c0_i32, %c0_i32_0 : i32, i32, i32
  }
}

</mosaic_0001>

<llo_original>
// kernel: tpu_custom_call.1
$region0: #{tpu_custom_call.1}
  #allocation0 [shape = 'u32[]', space=smem, size = 0x4, offset = 0x4, fixed_abs, tag = 'smem constant byte address 0x4 - core index']
  #allocation1 [shape = 'u32[144,128]{1,0:T(1,128)}', space=vmem, size = 0x12000, scoped, tag = 'internal scratch']
  #allocation2 [shape = 'f32[16,128]{1,0:T(8,128)}', space=vmem, size = 0x2000, scoped, tag = 'scratch operand']
  %s0 = inlined_call_operand.hbm [shape: f32[6,16,128], index: 0, kind: input, shape index: {}]
  %s1 = inlined_call_operand.hbm [shape: f32[16,128], index: 1, kind: input, shape index: {}]
  %s2 = inlined_call_operand.hbm [shape: f32[128,128], index: 2, kind: input, shape index: {}]
  %s3 = inlined_call_operand.hbm [shape: f32[128,128], index: 3, kind: input, shape index: {}]
  %s4 = inlined_call_operand.vmem [shape: f32[1,128], index: 4, kind: input, shape index: {}]
  %s5 = inlined_call_operand.hbm [shape: f32[128,128], index: 5, kind: input, shape index: {}]
  %s6 = inlined_call_operand.vmem [shape: f32[1,128], index: 6, kind: input, shape index: {}]
  %s7 = inlined_call_operand.hbm [shape: f32[6,16,128], index: 7, kind: output, shape index: {0}]
  %s8 = inlined_call_operand.hbm [shape: f32[6,16,128], index: 8, kind: output, shape index: {1}]
  %9 = xla_tuple %s7, %s8
  %s10 = sld [smem:[#allocation0]]
  $region70: #{tpu_custom_call.1} parent=0
    _
  %s12 = ssub.s32 1, %s10
  %s13 = scalar_select 0, %s12, %s10
  $region1: #{tpu_custom_call.1} parent=0
    #allocation3 [shape = 'u8[49152]{0}', space=vmem, size = 0xc000, scoped, tag = 'input window, operand 0, single buffered']
    #allocation4 [shape = 's32[1]{0}', space=sflag, size = 0x4, scoped, tag = 'scoped memory for tpu_custom_call.1']
    #allocation5 [shape = 's32[1]{0}', space=sflag, size = 0x4, scoped, tag = 'scoped memory for tpu_custom_call.1']
    #allocation6 [shape = 'u8[8192]{0}', space=vmem, size = 0x2000, scoped, tag = 'input window, operand 1, single buffered']
    #allocation7 [shape = 's32[1]{0}', space=sflag, size = 0x4, scoped, tag = 'scoped memory for tpu_custom_call.1']
    #allocation8 [shape = 'u8[65536]{0}', space=vmem, size = 0x10000, scoped, tag = 'input window, operand 2, single buffered']
    #allocation9 [shape = 'u8[65536]{0}', space=vmem, size = 0x10000, scoped, tag = 'input window, operand 3, single buffered']
    #allocation10 [shape = 's32[1]{0}', space=sflag, size = 0x4, scoped, tag = 'scoped memory for tpu_custom_call.1']
    #allocation11 [shape = 'u8[65536]{0}', space=vmem, size = 0x10000, scoped, tag = 'input window, operand 5, single buffered']
    #allocation12 [shape = 'u8[49152]{0}', space=vmem, size = 0xc000, scoped, tag = 'output window, operand 0, single buffered']
    #allocation13 [shape = 'u8[49152]{0}', space=vmem, size = 0xc000, scoped, tag = 'output window, operand 1, single buffered']
    #allocation14 [shape = 's32[1]{0}', space=sflag, size = 0x4, scoped, tag = 'scoped memory for tpu_custom_call.1']
    %14 = vsyncpa [#allocation4], 0
    %15 = vsyncpa [#allocation7], 0
    %16 = vsyncpa [#allocation10], 0
    %17 = vsyncpa [#allocation5], 0
    %18 = vsyncpa [#allocation14], 0
    // Predicated region
    $region2: #{tpu_custom_call.1} parent=1 // pred_check
      _
    $region3: #{tpu_custom_call.1} parent=1 // pred_check_branch
      %20 = sbr.rel (0) target = $region5
    $region4: #{tpu_custom_call.1} parent=1 // pred_region
      %s22 = ssub.s32 1536, 1536
      %23 = vsyncadd [#allocation4], %s22
      %s24 = sshll.u32 [#allocation3], 4
      %s25 = int_to_ptr.vmem [resolvable:$true] %s24
      %30 = dma.hbm_to_vmem [thread:$0]  %s0, 1536, %s25, [#allocation4], 128, 128, 8
    $region5: #{tpu_custom_call.1} parent=1 // pred_fallthru
      _
    // Predicated region
    $region6: #{tpu_custom_call.1} parent=1 // pred_check
      _
    $region7: #{tpu_custom_call.1} parent=1 // pred_check_branch
      %32 = sbr.rel (0) target = $region9
    $region8: #{tpu_custom_call.1} parent=1 // pred_region
      %s34 = ssub.s32 256, 256
      %35 = vsyncadd [#allocation7], %s34
      %s36 = sshll.u32 [#allocation6], 4
      %s37 = int_to_ptr.vmem [resolvable:$true] %s36
      %42 = dma.hbm_to_vmem [thread:$0]  %s1, 256, %s37, [#allocation7], 128, 128, 8
    $region9: #{tpu_custom_call.1} parent=1 // pred_fallthru
      _
    // Predicated region
    $region10: #{tpu_custom_call.1} parent=1 // pred_check
      _
    $region11: #{tpu_custom_call.1} parent=1 // pred_check_branch
      %44 = sbr.rel (0) target = $region13
    $region12: #{tpu_custom_call.1} parent=1 // pred_region
      %s46 = ssub.s32 2048, 2048
      %47 = vsyncadd [#allocation7], %s46
      %s48 = sshll.u32 [#allocation8], 4
      %s49 = int_to_ptr.vmem [resolvable:$true] %s48
      %54 = dma.hbm_to_vmem [thread:$0]  %s2, 2048, %s49, [#allocation7], 128, 128, 8
    $region13: #{tpu_custom_call.1} parent=1 // pred_fallthru
      _
    // Predicated region
    $region14: #{tpu_custom_call.1} parent=1 // pred_check
      _
    $region15: #{tpu_custom_call.1} parent=1 // pred_check_branch
      %56 = sbr.rel (0) target = $region17
    $region16: #{tpu_custom_call.1} parent=1 // pred_region
      %s58 = ssub.s32 2048, 2048
      %59 = vsyncadd [#allocation10], %s58
      %s60 = sshll.u32 [#allocation9], 4
      %s61 = int_to_ptr.vmem [resolvable:$true] %s60
      %66 = dma.hbm_to_vmem [thread:$0]  %s3, 2048, %s61, [#allocation10], 128, 128, 8
    $region17: #{tpu_custom_call.1} parent=1 // pred_fallthru
      _
    // Predicated region
    $region18: #{tpu_custom_call.1} parent=1 // pred_check
      _
    $region19: #{tpu_custom_call.1} parent=1 // pred_check_branch
      %68 = sbr.rel (0) target = $region21
    $region20: #{tpu_custom_call.1} parent=1 // pred_region
      _
    $region21: #{tpu_custom_call.1} parent=1 // pred_fallthru
      _
    // Predicated region
    $region22: #{tpu_custom_call.1} parent=1 // pred_check
      _
    $region23: #{tpu_custom_call.1} parent=1 // pred_check_branch
      %70 = sbr.rel (0) target = $region25
    $region24: #{tpu_custom_call.1} parent=1 // pred_region
      %s72 = ssub.s32 2048, 2048
      %73 = vsyncadd [#allocation10], %s72
      %s74 = sshll.u32 [#allocation11], 4
      %s75 = int_to_ptr.vmem [resolvable:$true] %s74
      %80 = dma.hbm_to_vmem [thread:$0]  %s5, 2048, %s75, [#allocation10], 128, 128, 8
    $region25: #{tpu_custom_call.1} parent=1 // pred_fallthru
      _
    // Predicated region
    $region26: #{tpu_custom_call.1} parent=1 // pred_check
      _
    $region27: #{tpu_custom_call.1} parent=1 // pred_check_branch
      %82 = sbr.rel (0) target = $region29
    $region28: #{tpu_custom_call.1} parent=1 // pred_region
      _
    $region29: #{tpu_custom_call.1} parent=1 // pred_fallthru
      _
    // Predicated region
    $region30: #{tpu_custom_call.1} parent=1 // pred_check
      _
    $region31: #{tpu_custom_call.1} parent=1 // pred_check_branch
      %84 = sbr.rel (0) target = $region33
    $region32: #{tpu_custom_call.1} parent=1 // pred_region
      %85 = dma.done [#allocation4], 1536
    $region33: #{tpu_custom_call.1} parent=1 // pred_fallthru
      _
    // Predicated region
    $region34: #{tpu_custom_call.1} parent=1 // pred_check
      _
    $region35: #{tpu_custom_call.1} parent=1 // pred_check_branch
      %87 = sbr.rel (0) target = $region37
    $region36: #{tpu_custom_call.1} parent=1 // pred_region
      %88 = dma.done [#allocation7], 256
    $region37: #{tpu_custom_call.1} parent=1 // pred_fallthru
      _
    // Predicated region
    $region38: #{tpu_custom_call.1} parent=1 // pred_check
      _
    $region39: #{tpu_custom_call.1} parent=1 // pred_check_branch
      %90 = sbr.rel (0) target = $region41
    $region40: #{tpu_custom_call.1} parent=1 // pred_region
      %91 = dma.done [#allocation7], 2048
    $region41: #{tpu_custom_call.1} parent=1 // pred_fallthru
      _
    // Predicated region
    $region42: #{tpu_custom_call.1} parent=1 // pred_check
      _
    $region43: #{tpu_custom_call.1} parent=1 // pred_check_branch
      %93 = sbr.rel (0) target = $region45
    $region44: #{tpu_custom_call.1} parent=1 // pred_region
      %94 = dma.done [#allocation10], 2048
    $region45: #{tpu_custom_call.1} parent=1 // pred_fallthru
      _
    // Predicated region
    $region46: #{tpu_custom_call.1} parent=1 // pred_check
      _
    $region47: #{tpu_custom_call.1} parent=1 // pred_check_branch
      %96 = sbr.rel (0) target = $region49
    $region48: #{tpu_custom_call.1} parent=1 // pred_region
      %97 = dma.done [#allocation10], 2048
    $region49: #{tpu_custom_call.1} parent=1 // pred_fallthru
      _
    %p98 = scmp.eq.s32.totalorder 0, 0
    // Predicated region
    $region50: #{tpu_custom_call.1} parent=1 // pred_check
      %p99 = pneg %p98
    $region51: #{tpu_custom_call.1} parent=1 // pred_check_branch
      %101 = sbr.rel (%p99) target = $region53
    $region52: #{tpu_custom_call.1} parent=1 // pred_region
      %v102 = vld [vmem:[#allocation6] sm:$0xff]
      %v103 = vld [vmem:[#allocation6 + $0x8] sm:$0xff]
      %104 = vst [vmem:[#allocation2] sm:$0xff] %v102
      %105 = vst [vmem:[#allocation2 + $0x8] sm:$0xff] %v103
    $region53: #{tpu_custom_call.1} parent=1 // pred_fallthru
      _
    %v106 = vld [vmem:[#allocation8] sm:$0xff]
    %v107 = vld [vmem:[#allocation8 + $0x8] sm:$0xff]
    %v108 = vld [vmem:[#allocation8 + $0x10] sm:$0xff]
    %v109 = vld [vmem:[#allocation8 + $0x18] sm:$0xff]
    %v110 = vld [vmem:[#allocation8 + $0x20] sm:$0xff]
    %v111 = vld [vmem:[#allocation8 + $0x28] sm:$0xff]
    %v112 = vld [vmem:[#allocation8 + $0x30] sm:$0xff]
    %v113 = vld [vmem:[#allocation8 + $0x38] sm:$0xff]
    %v114 = vld [vmem:[#allocation8 + $0x40] sm:$0xff]
    %v115 = vld [vmem:[#allocation8 + $0x48] sm:$0xff]
    %v116 = vld [vmem:[#allocation8 + $0x50] sm:$0xff]
    %v117 = vld [vmem:[#allocation8 + $0x58] sm:$0xff]
    %v118 = vld [vmem:[#allocation8 + $0x60] sm:$0xff]
    %v119 = vld [vmem:[#allocation8 + $0x68] sm:$0xff]
    %v120 = vld [vmem:[#allocation8 + $0x70] sm:$0xff]
    %v121 = vld [vmem:[#allocation8 + $0x78] sm:$0xff]
    %v122 = vld [vmem:[#allocation9] sm:$0xff]
    %v123 = vld [vmem:[#allocation9 + $0x8] sm:$0xff]
    %v124 = vld [vmem:[#allocation9 + $0x10] sm:$0xff]
    %v125 = vld [vmem:[#allocation9 + $0x18] sm:$0xff]
    %v126 = vld [vmem:[#allocation9 + $0x20] sm:$0xff]
    %v127 = vld [vmem:[#allocation9 + $0x28] sm:$0xff]
    %v128 = vld [vmem:[#allocation9 + $0x30] sm:$0xff]
    %v129 = vld [vmem:[#allocation9 + $0x38] sm:$0xff]
    %v130 = vld [vmem:[#allocation9 + $0x40] sm:$0xff]
    %v131 = vld [vmem:[#allocation9 + $0x48] sm:$0xff]
    %v132 = vld [vmem:[#allocation9 + $0x50] sm:$0xff]
    %v133 = vld [vmem:[#allocation9 + $0x58] sm:$0xff]
    %v134 = vld [vmem:[#allocation9 + $0x60] sm:$0xff]
    %v135 = vld [vmem:[#allocation9 + $0x68] sm:$0xff]
    %v136 = vld [vmem:[#allocation9 + $0x70] sm:$0xff]
    %v137 = vld [vmem:[#allocation9 + $0x78] sm:$0xff]
    %v138 = vld [vmem:[%s4] sm:$0x1]
    %v139 = vld [vmem:[#allocation11] sm:$0xff]
    %v140 = vld [vmem:[#allocation11 + $0x8] sm:$0xff]
    %v141 = vld [vmem:[#allocation11 + $0x10] sm:$0xff]
    %v142 = vld [vmem:[#allocation11 + $0x18] sm:$0xff]
    %v143 = vld [vmem:[#allocation11 + $0x20] sm:$0xff]
    %v144 = vld [vmem:[#allocation11 + $0x28] sm:$0xff]
    %v145 = vld [vmem:[#allocation11 + $0x30] sm:$0xff]
    %v146 = vld [vmem:[#allocation11 + $0x38] sm:$0xff]
    %v147 = vld [vmem:[#allocation11 + $0x40] sm:$0xff]
    %v148 = vld [vmem:[#allocation11 + $0x48] sm:$0xff]
    %v149 = vld [vmem:[#allocation11 + $0x50] sm:$0xff]
    %v150 = vld [vmem:[#allocation11 + $0x58] sm:$0xff]
    %v151 = vld [vmem:[#allocation11 + $0x60] sm:$0xff]
    %v152 = vld [vmem:[#allocation11 + $0x68] sm:$0xff]
    %v153 = vld [vmem:[#allocation11 + $0x70] sm:$0xff]
    %v154 = vld [vmem:[#allocation11 + $0x78] sm:$0xff]
    %v155 = vld [vmem:[%s6] sm:$0x1]
    %v156 = vld [vmem:[#allocation2] sm:$0xff]
    %v157 = vld [vmem:[#allocation2 + $0x8] sm:$0xff]
    %v158 = vld [vmem:[#allocation3] sm:$0xff]
    %v159 = vld [vmem:[#allocation3 + $0x8] sm:$0xff]
    %160 = vmatprep.subr.mxu0 0.0
    %161 = vmatpush1.msra.mxu0 %v137
    %162 = vmatprep.subr.mxu0 0.0
    %163 = vmatpush1.msra.mxu0 %v136
    %164 = vmatprep.subr.mxu0 0.0
    %165 = vmatpush1.msra.mxu0 %v135
    %166 = vmatprep.subr.mxu0 0.0
    %167 = vmatpush1.msra.mxu0 %v134
    %168 = vmatprep.subr.mxu0 0.0
    %169 = vmatpush1.msra.mxu0 %v133
    %170 = vmatprep.subr.mxu0 0.0
    %171 = vmatpush1.msra.mxu0 %v132
    %172 = vmatprep.subr.mxu0 0.0
    %173 = vmatpush1.msra.mxu0 %v131
    %174 = vmatprep.subr.mxu0 0.0
    %175 = vmatpush1.msra.mxu0 %v130
    %176 = vmatprep.subr.mxu0 0.0
    %177 = vmatpush1.msra.mxu0 %v129
    %178 = vmatprep.subr.mxu0 0.0
    %179 = vmatpush1.msra.mxu0 %v128
    %180 = vmatprep.subr.mxu0 0.0
    %181 = vmatpush1.msra.mxu0 %v127
    %182 = vmatprep.subr.mxu0 0.0
    %183 = vmatpush1.msra.mxu0 %v126
    %184 = vmatprep.subr.mxu0 0.0
    %185 = vmatpush1.msra.mxu0 %v125
    %186 = vmatprep.subr.mxu0 0.0
    %187 = vmatpush1.msra.mxu0 %v124
    %188 = vmatprep.subr.mxu0 0.0
    %189 = vmatpush1.msra.mxu0 %v123
    %190 = vmatprep.subr.mxu0 0.0
    %191 = vmatpush1.msra.mxu0 %v122
    %192 = vmatprep.subr.mxu0 0.0
    %193 = vmatpush2.msra.mxu0 0.0
    %194 = vmatprep.subr.mxu0 0.0
    %195 = vmatpush2.msra.mxu0 0.0
    %196 = vmatprep.subr.mxu0 0.0
    %197 = vmatpush2.msra.mxu0 0.0
    %198 = vmatprep.subr.mxu0 0.0
    %199 = vmatpush2.msra.mxu0 0.0
    %200 = vmatprep.subr.mxu0 0.0
    %201 = vmatpush2.msra.mxu0 0.0
    %202 = vmatprep.subr.mxu0 0.0
    %203 = vmatpush2.msra.mxu0 0.0
    %204 = vmatprep.subr.mxu0 0.0
    %205 = vmatpush2.msra.mxu0 0.0
    %206 = vmatprep.subr.mxu0 0.0
    %207 = vmatpush2.msra.mxu0 0.0
    %208 = vmatprep.subr.mxu0 0.0
    %209 = vmatpush2.msra.mxu0 0.0
    %210 = vmatprep.subr.mxu0 0.0
    %211 = vmatpush2.msra.mxu0 0.0
    %212 = vmatprep.subr.mxu0 0.0
    %213 = vmatpush2.msra.mxu0 0.0
    %214 = vmatprep.subr.mxu0 0.0
    %215 = vmatpush2.msra.mxu0 0.0
    %216 = vmatprep.subr.mxu0 0.0
    %217 = vmatpush2.msra.mxu0 0.0
    %218 = vmatprep.subr.mxu0 0.0
    %219 = vmatpush2.msra.mxu0 0.0
    %220 = vmatprep.subr.mxu0 0.0
    %221 = vmatpush2.msra.mxu0 0.0
    %222 = vmatprep.subr.mxu0 0.0
    %223 = vmatpush2.msra.mxu0 0.0
    %224 = vmatprep.mubr.f32.mxu0 0.0
    %225 = vmatmul.mubr.f32.gmra.mxu0 %v156
    %v226 = vpop.f32.mrf.mxu0
    %v227 = vadd.f32 0.0, %v226
    %v228 = vpop.f32.mrf.mxu0
    %229 = vmatprep.mubr.f32.mxu0 0.0
    %230 = vmatmul.mubr.f32.gmra.mxu0 %v157
    %v231 = vpop.f32.mrf.mxu0
    %v232 = vadd.f32 0.0, %v231
    %v233 = vpop.f32.mrf.mxu0
    %234 = vdwg.mxu0
    %235 = vmatprep.subr.mxu0 0.0
    %236 = vmatpush1.msra.mxu0 %v121
    %237 = vmatprep.subr.mxu0 0.0
    %238 = vmatpush1.msra.mxu0 %v120
    %239 = vmatprep.subr.mxu0 0.0
    %240 = vmatpush1.msra.mxu0 %v119
    %241 = vmatprep.subr.mxu0 0.0
    %242 = vmatpush1.msra.mxu0 %v118
    %243 = vmatprep.subr.mxu0 0.0
    %244 = vmatpush1.msra.mxu0 %v117
    %245 = vmatprep.subr.mxu0 0.0
    %246 = vmatpush1.msra.mxu0 %v116
    %247 = vmatprep.subr.mxu0 0.0
    %248 = vmatpush1.msra.mxu0 %v115
    %249 = vmatprep.subr.mxu0 0.0
    %250 = vmatpush1.msra.mxu0 %v114
    %251 = vmatprep.subr.mxu0 0.0
    %252 = vmatpush1.msra.mxu0 %v113
    %253 = vmatprep.subr.mxu0 0.0
    %254 = vmatpush1.msra.mxu0 %v112
    %255 = vmatprep.subr.mxu0 0.0
    %256 = vmatpush1.msra.mxu0 %v111
    %257 = vmatprep.subr.mxu0 0.0
    %258 = vmatpush1.msra.mxu0 %v110
    %259 = vmatprep.subr.mxu0 0.0
    %260 = vmatpush1.msra.mxu0 %v109
    %261 = vmatprep.subr.mxu0 0.0
    %262 = vmatpush1.msra.mxu0 %v108
    %263 = vmatprep.subr.mxu0 0.0
    %264 = vmatpush1.msra.mxu0 %v107
    %265 = vmatprep.subr.mxu0 0.0
    %266 = vmatpush1.msra.mxu0 %v106
    %267 = vmatprep.subr.mxu0 0.0
    %268 = vmatpush2.msra.mxu0 0.0
    %269 = vmatprep.subr.mxu0 0.0
    %270 = vmatpush2.msra.mxu0 0.0
    %271 = vmatprep.subr.mxu0 0.0
    %272 = vmatpush2.msra.mxu0 0.0
    %273 = vmatprep.subr.mxu0 0.0
    %274 = vmatpush2.msra.mxu0 0.0
    %275 = vmatprep.subr.mxu0 0.0
    %276 = vmatpush2.msra.mxu0 0.0
    %277 = vmatprep.subr.mxu0 0.0
    %278 = vmatpush2.msra.mxu0 0.0
    %279 = vmatprep.subr.mxu0 0.0
    %280 = vmatpush2.msra.mxu0 0.0
    %281 = vmatprep.subr.mxu0 0.0
    %282 = vmatpush2.msra.mxu0 0.0
    %283 = vmatprep.subr.mxu0 0.0
    %284 = vmatpush2.msra.mxu0 0.0
    %285 = vmatprep.subr.mxu0 0.0
    %286 = vmatpush2.msra.mxu0 0.0
    %287 = vmatprep.subr.mxu0 0.0
    %288 = vmatpush2.msra.mxu0 0.0
    %289 = vmatprep.subr.mxu0 0.0
    %290 = vmatpush2.msra.mxu0 0.0
    %291 = vmatprep.subr.mxu0 0.0
    %292 = vmatpush2.msra.mxu0 0.0
    %293 = vmatprep.subr.mxu0 0.0
    %294 = vmatpush2.msra.mxu0 0.0
    %295 = vmatprep.subr.mxu0 0.0
    %296 = vmatpush2.msra.mxu0 0.0
    %297 = vmatprep.subr.mxu0 0.0
    %298 = vmatpush2.msra.mxu0 0.0
    %299 = vmatprep.mubr.f32.mxu0 0.0
    %300 = vmatmul.mubr.f32.gmra.mxu0 %v158
    %v301 = vpop.f32.mrf.mxu0
    %v302 = vadd.f32 %v227, %v301
    %v303 = vpop.f32.mrf.mxu0
    %304 = vmatprep.mubr.f32.mxu0 0.0
    %305 = vmatmul.mubr.f32.gmra.mxu0 %v159
    %v306 = vpop.f32.mrf.mxu0
    %v307 = vadd.f32 %v232, %v306
    %v308 = vpop.f32.mrf.mxu0
    %309 = vdwg.mxu0
    %v311 = vlaneseq
    %v312 = vshrl.u32 %v311, 7
    %v313 = vsub.s32 0, %v312
    %v314 = vrot.slane %v138, %v313
    %v316 = vadd.f32 %v302, %v314
    %v317 = vadd.f32 %v307, %v314
    %318 = vst [vmem:[#allocation12] sm:$0xff] %v316
    %319 = vst [vmem:[#allocation12 + $0x8] sm:$0xff] %v317
    %v321 = vlaneseq
    %v322 = vshrl.u32 %v321, 7
    %v323 = vsub.s32 0, %v322
    %v324 = vrot.slane %v155, %v323
    %326 = vmatprep.subr.mxu0 0.0
    %327 = vmatpush1.msra.mxu0 %v154
    %328 = vmatprep.subr.mxu0 0.0
    %329 = vmatpush1.msra.mxu0 %v153
    %330 = vmatprep.subr.mxu0 0.0
    %331 = vmatpush1.msra.mxu0 %v152
    %332 = vmatprep.subr.mxu0 0.0
    %333 = vmatpush1.msra.mxu0 %v151
    %334 = vmatprep.subr.mxu0 0.0
    %335 = vmatpush1.msra.mxu0 %v150
    %336 = vmatprep.subr.mxu0 0.0
    %337 = vmatpush1.msra.mxu0 %v149
    %338 = vmatprep.subr.mxu0 0.0
    %339 = vmatpush1.msra.mxu0 %v148
    %340 = vmatprep.subr.mxu0 0.0
    %341 = vmatpush1.msra.mxu0 %v147
    %342 = vmatprep.subr.mxu0 0.0
    %343 = vmatpush1.msra.mxu0 %v146
    %344 = vmatprep.subr.mxu0 0.0
    %345 = vmatpush1.msra.mxu0 %v145
    %346 = vmatprep.subr.mxu0 0.0
    %347 = vmatpush1.msra.mxu0 %v144
    %348 = vmatprep.subr.mxu0 0.0
    %349 = vmatpush1.msra.mxu0 %v143
    %350 = vmatprep.subr.mxu0 0.0
    %351 = vmatpush1.msra.mxu0 %v142
    %352 = vmatprep.subr.mxu0 0.0
    %353 = vmatpush1.msra.mxu0 %v141
    %354 = vmatprep.subr.mxu0 0.0
    %355 = vmatpush1.msra.mxu0 %v140
    %356 = vmatprep.subr.mxu0 0.0
    %357 = vmatpush1.msra.mxu0 %v139
    %358 = vmatprep.subr.mxu0 0.0
    %359 = vmatpush2.msra.mxu0 0.0
    %360 = vmatprep.subr.mxu0 0.0
    %361 = vmatpush2.msra.mxu0 0.0
    %362 = vmatprep.subr.mxu0 0.0
    %363 = vmatpush2.msra.mxu0 0.0
    %364 = vmatprep.subr.mxu0 0.0
    %365 = vmatpush2.msra.mxu0 0.0
    %366 = vmatprep.subr.mxu0 0.0
    %367 = vmatpush2.msra.mxu0 0.0
    %368 = vmatprep.subr.mxu0 0.0
    %369 = vmatpush2.msra.mxu0 0.0
    %370 = vmatprep.subr.mxu0 0.0
    %371 = vmatpush2.msra.mxu0 0.0
    %372 = vmatprep.subr.mxu0 0.0
    %373 = vmatpush2.msra.mxu0 0.0
    %374 = vmatprep.subr.mxu0 0.0
    %375 = vmatpush2.msra.mxu0 0.0
    %376 = vmatprep.subr.mxu0 0.0
    %377 = vmatpush2.msra.mxu0 0.0
    %378 = vmatprep.subr.mxu0 0.0
    %379 = vmatpush2.msra.mxu0 0.0
    %380 = vmatprep.subr.mxu0 0.0
    %381 = vmatpush2.msra.mxu0 0.0
    %382 = vmatprep.subr.mxu0 0.0
    %383 = vmatpush2.msra.mxu0 0.0
    %384 = vmatprep.subr.mxu0 0.0
    %385 = vmatpush2.msra.mxu0 0.0
    %386 = vmatprep.subr.mxu0 0.0
    %387 = vmatpush2.msra.mxu0 0.0
    %388 = vmatprep.subr.mxu0 0.0
    %389 = vmatpush2.msra.mxu0 0.0
    %390 = vmatprep.mubr.f32.mxu0 0.0
    %391 = vmatmul.mubr.f32.gmra.mxu0 %v316
    %v392 = vpop.f32.mrf.mxu0
    %v393 = vadd.f32 %v324, %v392
    %v394 = vpop.f32.mrf.mxu0
    %395 = vmatprep.mubr.f32.mxu0 0.0
    %396 = vmatmul.mubr.f32.gmra.mxu0 %v317
    %v397 = vpop.f32.mrf.mxu0
    %v398 = vadd.f32 %v324, %v397
    %v399 = vpop.f32.mrf.mxu0
    %400 = vdwg.mxu0
    %401 = vst [vmem:[#allocation13] sm:$0xff] %v393
    %402 = vst [vmem:[#allocation13 + $0x8] sm:$0xff] %v398
    %s403 = scalar_lea.vmem [#allocation3], 16
    %v404 = vld [vmem:[%s403] sm:$0xff]
    %v405 = vld [vmem:[%s403 + $0x8] sm:$0xff]
    %406 = vmatprep.subr.mxu0 0.0
    %407 = vmatpush1.msra.mxu0 %v137
    %408 = vmatprep.subr.mxu0 0.0
    %409 = vmatpush1.msra.mxu0 %v136
    %410 = vmatprep.subr.mxu0 0.0
    %411 = vmatpush1.msra.mxu0 %v135
    %412 = vmatprep.subr.mxu0 0.0
    %413 = vmatpush1.msra.mxu0 %v134
    %414 = vmatprep.subr.mxu0 0.0
    %415 = vmatpush1.msra.mxu0 %v133
    %416 = vmatprep.subr.mxu0 0.0
    %417 = vmatpush1.msra.mxu0 %v132
    %418 = vmatprep.subr.mxu0 0.0
    %419 = vmatpush1.msra.mxu0 %v131
    %420 = vmatprep.subr.mxu0 0.0
    %421 = vmatpush1.msra.mxu0 %v130
    %422 = vmatprep.subr.mxu0 0.0
    %423 = vmatpush1.msra.mxu0 %v129
    %424 = vmatprep.subr.mxu0 0.0
    %425 = vmatpush1.msra.mxu0 %v128
    %426 = vmatprep.subr.mxu0 0.0
    %427 = vmatpush1.msra.mxu0 %v127
    %428 = vmatprep.subr.mxu0 0.0
    %429 = vmatpush1.msra.mxu0 %v126
    %430 = vmatprep.subr.mxu0 0.0
    %431 = vmatpush1.msra.mxu0 %v125
    %432 = vmatprep.subr.mxu0 0.0
    %433 = vmatpush1.msra.mxu0 %v124
    %434 = vmatprep.subr.mxu0 0.0
    %435 = vmatpush1.msra.mxu0 %v123
    %436 = vmatprep.subr.mxu0 0.0
    %437 = vmatpush1.msra.mxu0 %v122
    %438 = vmatprep.subr.mxu0 0.0
    %439 = vmatpush2.msra.mxu0 0.0
    %440 = vmatprep.subr.mxu0 0.0
    %441 = vmatpush2.msra.mxu0 0.0
    %442 = vmatprep.subr.mxu0 0.0
    %443 = vmatpush2.msra.mxu0 0.0
    %444 = vmatprep.subr.mxu0 0.0
    %445 = vmatpush2.msra.mxu0 0.0
    %446 = vmatprep.subr.mxu0 0.0
    %447 = vmatpush2.msra.mxu0 0.0
    %448 = vmatprep.subr.mxu0 0.0
    %449 = vmatpush2.msra.mxu0 0.0
    %450 = vmatprep.subr.mxu0 0.0
    %451 = vmatpush2.msra.mxu0 0.0
    %452 = vmatprep.subr.mxu0 0.0
    %453 = vmatpush2.msra.mxu0 0.0
    %454 = vmatprep.subr.mxu0 0.0
    %455 = vmatpush2.msra.mxu0 0.0
    %456 = vmatprep.subr.mxu0 0.0
    %457 = vmatpush2.msra.mxu0 0.0
    %458 = vmatprep.subr.mxu0 0.0
    %459 = vmatpush2.msra.mxu0 0.0
    %460 = vmatprep.subr.mxu0 0.0
    %461 = vmatpush2.msra.mxu0 0.0
    %462 = vmatprep.subr.mxu0 0.0
    %463 = vmatpush2.msra.mxu0 0.0
    %464 = vmatprep.subr.mxu0 0.0
    %465 = vmatpush2.msra.mxu0 0.0
    %466 = vmatprep.subr.mxu0 0.0
    %467 = vmatpush2.msra.mxu0 0.0
    %468 = vmatprep.subr.mxu0 0.0
    %469 = vmatpush2.msra.mxu0 0.0
    %470 = vmatprep.mubr.f32.mxu0 0.0
    %471 = vmatmul.mubr.f32.gmra.mxu0 %v316
    %v472 = vpop.f32.mrf.mxu0
    %v473 = vadd.f32 0.0, %v472
    %v474 = vpop.f32.mrf.mxu0
    %475 = vmatprep.mubr.f32.mxu0 0.0
    %476 = vmatmul.mubr.f32.gmra.mxu0 %v317
    %v477 = vpop.f32.mrf.mxu0
    %v478 = vadd.f32 0.0, %v477
    %v479 = vpop.f32.mrf.mxu0
    %480 = vdwg.mxu0
    %481 = vmatprep.subr.mxu0 0.0
    %482 = vmatpush1.msra.mxu0 %v121
    %483 = vmatprep.subr.mxu0 0.0
    %484 = vmatpush1.msra.mxu0 %v120
    %485 = vmatprep.subr.mxu0 0.0
    %486 = vmatpush1.msra.mxu0 %v119
    %487 = vmatprep.subr.mxu0 0.0
    %488 = vmatpush1.msra.mxu0 %v118
    %489 = vmatprep.subr.mxu0 0.0
    %490 = vmatpush1.msra.mxu0 %v117
    %491 = vmatprep.subr.mxu0 0.0
    %492 = vmatpush1.msra.mxu0 %v116
    %493 = vmatprep.subr.mxu0 0.0
    %494 = vmatpush1.msra.mxu0 %v115
    %495 = vmatprep.subr.mxu0 0.0
    %496 = vmatpush1.msra.mxu0 %v114
    %497 = vmatprep.subr.mxu0 0.0
    %498 = vmatpush1.msra.mxu0 %v113
    %499 = vmatprep.subr.mxu0 0.0
    %500 = vmatpush1.msra.mxu0 %v112
    %501 = vmatprep.subr.mxu0 0.0
    %502 = vmatpush1.msra.mxu0 %v111
    %503 = vmatprep.subr.mxu0 0.0
    %504 = vmatpush1.msra.mxu0 %v110
    %505 = vmatprep.subr.mxu0 0.0
    %506 = vmatpush1.msra.mxu0 %v109
    %507 = vmatprep.subr.mxu0 0.0
    %508 = vmatpush1.msra.mxu0 %v108
    %509 = vmatprep.subr.mxu0 0.0
    %510 = vmatpush1.msra.mxu0 %v107
    %511 = vmatprep.subr.mxu0 0.0
    %512 = vmatpush1.msra.mxu0 %v106
    %513 = vmatprep.subr.mxu0 0.0
    %514 = vmatpush2.msra.mxu0 0.0
    %515 = vmatprep.subr.mxu0 0.0
    %516 = vmatpush2.msra.mxu0 0.0
    %517 = vmatprep.subr.mxu0 0.0
    %518 = vmatpush2.msra.mxu0 0.0
    %519 = vmatprep.subr.mxu0 0.0
    %520 = vmatpush2.msra.mxu0 0.0
    %521 = vmatprep.subr.mxu0 0.0
    %522 = vmatpush2.msra.mxu0 0.0
    %523 = vmatprep.subr.mxu0 0.0
    %524 = vmatpush2.msra.mxu0 0.0
    %525 = vmatprep.subr.mxu0 0.0
    %526 = vmatpush2.msra.mxu0 0.0
    %527 = vmatprep.subr.mxu0 0.0
    %528 = vmatpush2.msra.mxu0 0.0
    %529 = vmatprep.subr.mxu0 0.0
    %530 = vmatpush2.msra.mxu0 0.0
    %531 = vmatprep.subr.mxu0 0.0
    %532 = vmatpush2.msra.mxu0 0.0
    %533 = vmatprep.subr.mxu0 0.0
    %534 = vmatpush2.msra.mxu0 0.0
    %535 = vmatprep.subr.mxu0 0.0
    %536 = vmatpush2.msra.mxu0 0.0
    %537 = vmatprep.subr.mxu0 0.0
    %538 = vmatpush2.msra.mxu0 0.0
    %539 = vmatprep.subr.mxu0 0.0
    %540 = vmatpush2.msra.mxu0 0.0
    %541 = vmatprep.subr.mxu0 0.0
    %542 = vmatpush2.msra.mxu0 0.0
    %543 = vmatprep.subr.mxu0 0.0
    %544 = vmatpush2.msra.mxu0 0.0
    %545 = vmatprep.mubr.f32.mxu0 0.0
    %546 = vmatmul.mubr.f32.gmra.mxu0 %v404
    %v547 = vpop.f32.mrf.mxu0
    %v548 = vadd.f32 %v473, %v547
    %v549 = vpop.f32.mrf.mxu0
    %550 = vmatprep.mubr.f32.mxu0 0.0
    %551 = vmatmul.mubr.f32.gmra.mxu0 %v405
    %v552 = vpop.f32.mrf.mxu0
    %v553 = vadd.f32 %v478, %v552
    %v554 = vpop.f32.mrf.mxu0
    %555 = vdwg.mxu0
    %v556 = vadd.f32 %v548, %v314
    %v557 = vadd.f32 %v553, %v314
    %s558 = scalar_lea.vmem [#allocation12], 16
    %559 = vst [vmem:[%s558] sm:$0xff] %v556
    %560 = vst [vmem:[%s558 + $0x8] sm:$0xff] %v557
    %561 = vmatprep.subr.mxu0 0.0
    %562 = vmatpush1.msra.mxu0 %v154
    %563 = vmatprep.subr.mxu0 0.0
    %564 = vmatpush1.msra.mxu0 %v153
    %565 = vmatprep.subr.mxu0 0.0
    %566 = vmatpush1.msra.mxu0 %v152
    %567 = vmatprep.subr.mxu0 0.0
    %568 = vmatpush1.msra.mxu0 %v151
    %569 = vmatprep.subr.mxu0 0.0
    %570 = vmatpush1.msra.mxu0 %v150
    %571 = vmatprep.subr.mxu0 0.0
    %572 = vmatpush1.msra.mxu0 %v149
    %573 = vmatprep.subr.mxu0 0.0
    %574 = vmatpush1.msra.mxu0 %v148
    %575 = vmatprep.subr.mxu0 0.0
    %576 = vmatpush1.msra.mxu0 %v147
    %577 = vmatprep.subr.mxu0 0.0
    %578 = vmatpush1.msra.mxu0 %v146
    %579 = vmatprep.subr.mxu0 0.0
    %580 = vmatpush1.msra.mxu0 %v145
    %581 = vmatprep.subr.mxu0 0.0
    %582 = vmatpush1.msra.mxu0 %v144
    %583 = vmatprep.subr.mxu0 0.0
    %584 = vmatpush1.msra.mxu0 %v143
    %585 = vmatprep.subr.mxu0 0.0
    %586 = vmatpush1.msra.mxu0 %v142
    %587 = vmatprep.subr.mxu0 0.0
    %588 = vmatpush1.msra.mxu0 %v141
    %589 = vmatprep.subr.mxu0 0.0
    %590 = vmatpush1.msra.mxu0 %v140
    %591 = vmatprep.subr.mxu0 0.0
    %592 = vmatpush1.msra.mxu0 %v139
    %593 = vmatprep.subr.mxu0 0.0
    %594 = vmatpush2.msra.mxu0 0.0
    %595 = vmatprep.subr.mxu0 0.0
    %596 = vmatpush2.msra.mxu0 0.0
    %597 = vmatprep.subr.mxu0 0.0
    %598 = vmatpush2.msra.mxu0 0.0
    %599 = vmatprep.subr.mxu0 0.0
    %600 = vmatpush2.msra.mxu0 0.0
    %601 = vmatprep.subr.mxu0 0.0
    %602 = vmatpush2.msra.mxu0 0.0
    %603 = vmatprep.subr.mxu0 0.0
    %604 = vmatpush2.msra.mxu0 0.0
    %605 = vmatprep.subr.mxu0 0.0
    %606 = vmatpush2.msra.mxu0 0.0
    %607 = vmatprep.subr.mxu0 0.0
    %608 = vmatpush2.msra.mxu0 0.0
    %609 = vmatprep.subr.mxu0 0.0
    %610 = vmatpush2.msra.mxu0 0.0
    %611 = vmatprep.subr.mxu0 0.0
    %612 = vmatpush2.msra.mxu0 0.0
    %613 = vmatprep.subr.mxu0 0.0
    %614 = vmatpush2.msra.mxu0 0.0
    %615 = vmatprep.subr.mxu0 0.0
    %616 = vmatpush2.msra.mxu0 0.0
    %617 = vmatprep.subr.mxu0 0.0
    %618 = vmatpush2.msra.mxu0 0.0
    %619 = vmatprep.subr.mxu0 0.0
    %620 = vmatpush2.msra.mxu0 0.0
    %621 = vmatprep.subr.mxu0 0.0
    %622 = vmatpush2.msra.mxu0 0.0
    %623 = vmatprep.subr.mxu0 0.0
    %624 = vmatpush2.msra.mxu0 0.0
    %625 = vmatprep.mubr.f32.mxu0 0.0
    %626 = vmatmul.mubr.f32.gmra.mxu0 %v556
    %v627 = vpop.f32.mrf.mxu0
    %v628 = vadd.f32 %v324, %v627
    %v629 = vpop.f32.mrf.mxu0
    %630 = vmatprep.mubr.f32.mxu0 0.0
    %631 = vmatmul.mubr.f32.gmra.mxu0 %v557
    %v632 = vpop.f32.mrf.mxu0
    %v633 = vadd.f32 %v324, %v632
    %v634 = vpop.f32.mrf.mxu0
    %635 = vdwg.mxu0
    %s636 = scalar_lea.vmem [#allocation13], 16
    %637 = vst [vmem:[%s636] sm:$0xff] %v628
    %638 = vst [vmem:[%s636 + $0x8] sm:$0xff] %v633
    %s639 = scalar_lea.vmem [#allocation3], 32
    %v640 = vld [vmem:[%s639] sm:$0xff]
    %v641 = vld [vmem:[%s639 + $0x8] sm:$0xff]
    %642 = vmatprep.subr.mxu0 0.0
    %643 = vmatpush1.msra.mxu0 %v137
    %644 = vmatprep.subr.mxu0 0.0
    %645 = vmatpush1.msra.mxu0 %v136
    %646 = vmatprep.subr.mxu0 0.0
    %647 = vmatpush1.msra.mxu0 %v135
    %648 = vmatprep.subr.mxu0 0.0
    %649 = vmatpush1.msra.mxu0 %v134
    %650 = vmatprep.subr.mxu0 0.0
    %651 = vmatpush1.msra.mxu0 %v133
    %652 = vmatprep.subr.mxu0 0.0
    %653 = vmatpush1.msra.mxu0 %v132
    %654 = vmatprep.subr.mxu0 0.0
    %655 = vmatpush1.msra.mxu0 %v131
    %656 = vmatprep.subr.mxu0 0.0
    %657 = vmatpush1.msra.mxu0 %v130
    %658 = vmatprep.subr.mxu0 0.0
    %659 = vmatpush1.msra.mxu0 %v129
    %660 = vmatprep.subr.mxu0 0.0
    %661 = vmatpush1.msra.mxu0 %v128
    %662 = vmatprep.subr.mxu0 0.0
    %663 = vmatpush1.msra.mxu0 %v127
    %664 = vmatprep.subr.mxu0 0.0
    %665 = vmatpush1.msra.mxu0 %v126
    %666 = vmatprep.subr.mxu0 0.0
    %667 = vmatpush1.msra.mxu0 %v125
    %668 = vmatprep.subr.mxu0 0.0
    %669 = vmatpush1.msra.mxu0 %v124
    %670 = vmatprep.subr.mxu0 0.0
    %671 = vmatpush1.msra.mxu0 %v123
    %672 = vmatprep.subr.mxu0 0.0
    %673 = vmatpush1.msra.mxu0 %v122
    %674 = vmatprep.subr.mxu0 0.0
    %675 = vmatpush2.msra.mxu0 0.0
    %676 = vmatprep.subr.mxu0 0.0
    %677 = vmatpush2.msra.mxu0 0.0
    %678 = vmatprep.subr.mxu0 0.0
    %679 = vmatpush2.msra.mxu0 0.0
    %680 = vmatprep.subr.mxu0 0.0
    %681 = vmatpush2.msra.mxu0 0.0
    %682 = vmatprep.subr.mxu0 0.0
    %683 = vmatpush2.msra.mxu0 0.0
    %684 = vmatprep.subr.mxu0 0.0
    %685 = vmatpush2.msra.mxu0 0.0
    %686 = vmatprep.subr.mxu0 0.0
    %687 = vmatpush2.msra.mxu0 0.0
    %688 = vmatprep.subr.mxu0 0.0
    %689 = vmatpush2.msra.mxu0 0.0
    %690 = vmatprep.subr.mxu0 0.0
    %691 = vmatpush2.msra.mxu0 0.0
    %692 = vmatprep.subr.mxu0 0.0
    %693 = vmatpush2.msra.mxu0 0.0
    %694 = vmatprep.subr.mxu0 0.0
    %695 = vmatpush2.msra.mxu0 0.0
    %696 = vmatprep.subr.mxu0 0.0
    %697 = vmatpush2.msra.mxu0 0.0
    %698 = vmatprep.subr.mxu0 0.0
    %699 = vmatpush2.msra.mxu0 0.0
    %700 = vmatprep.subr.mxu0 0.0
    %701 = vmatpush2.msra.mxu0 0.0
    %702 = vmatprep.subr.mxu0 0.0
    %703 = vmatpush2.msra.mxu0 0.0
    %704 = vmatprep.subr.mxu0 0.0
    %705 = vmatpush2.msra.mxu0 0.0
    %706 = vmatprep.mubr.f32.mxu0 0.0
    %707 = vmatmul.mubr.f32.gmra.mxu0 %v556
    %v708 = vpop.f32.mrf.mxu0
    %v709 = vadd.f32 0.0, %v708
    %v710 = vpop.f32.mrf.mxu0
    %711 = vmatprep.mubr.f32.mxu0 0.0
    %712 = vmatmul.mubr.f32.gmra.mxu0 %v557
    %v713 = vpop.f32.mrf.mxu0
    %v714 = vadd.f32 0.0, %v713
    %v715 = vpop.f32.mrf.mxu0
    %716 = vdwg.mxu0
    %717 = vmatprep.subr.mxu0 0.0
    %718 = vmatpush1.msra.mxu0 %v121
    %719 = vmatprep.subr.mxu0 0.0
    %720 = vmatpush1.msra.mxu0 %v120
    %721 = vmatprep.subr.mxu0 0.0
    %722 = vmatpush1.msra.mxu0 %v119
    %723 = vmatprep.subr.mxu0 0.0
    %724 = vmatpush1.msra.mxu0 %v118
    %725 = vmatprep.subr.mxu0 0.0
    %726 = vmatpush1.msra.mxu0 %v117
    %727 = vmatprep.subr.mxu0 0.0
    %728 = vmatpush1.msra.mxu0 %v116
    %729 = vmatprep.subr.mxu0 0.0
    %730 = vmatpush1.msra.mxu0 %v115
    %731 = vmatprep.subr.mxu0 0.0
    %732 = vmatpush1.msra.mxu0 %v114
    %733 = vmatprep.subr.mxu0 0.0
    %734 = vmatpush1.msra.mxu0 %v113
    %735 = vmatprep.subr.mxu0 0.0
    %736 = vmatpush1.msra.mxu0 %v112
    %737 = vmatprep.subr.mxu0 0.0
    %738 = vmatpush1.msra.mxu0 %v111
    %739 = vmatprep.subr.mxu0 0.0
    %740 = vmatpush1.msra.mxu0 %v110
    %741 = vmatprep.subr.mxu0 0.0
    %742 = vmatpush1.msra.mxu0 %v109
    %743 = vmatprep.subr.mxu0 0.0
    %744 = vmatpush1.msra.mxu0 %v108
    %745 = vmatprep.subr.mxu0 0.0
    %746 = vmatpush1.msra.mxu0 %v107
    %747 = vmatprep.subr.mxu0 0.0
    %748 = vmatpush1.msra.mxu0 %v106
    %749 = vmatprep.subr.mxu0 0.0
    %750 = vmatpush2.msra.mxu0 0.0
    %751 = vmatprep.subr.mxu0 0.0
    %752 = vmatpush2.msra.mxu0 0.0
    %753 = vmatprep.subr.mxu0 0.0
    %754 = vmatpush2.msra.mxu0 0.0
    %755 = vmatprep.subr.mxu0 0.0
    %756 = vmatpush2.msra.mxu0 0.0
    %757 = vmatprep.subr.mxu0 0.0
    %758 = vmatpush2.msra.mxu0 0.0
    %759 = vmatprep.subr.mxu0 0.0
    %760 = vmatpush2.msra.mxu0 0.0
    %761 = vmatprep.subr.mxu0 0.0
    %762 = vmatpush2.msra.mxu0 0.0
    %763 = vmatprep.subr.mxu0 0.0
    %764 = vmatpush2.msra.mxu0 0.0
    %765 = vmatprep.subr.mxu0 0.0
    %766 = vmatpush2.msra.mxu0 0.0
    %767 = vmatprep.subr.mxu0 0.0
    %768 = vmatpush2.msra.mxu0 0.0
    %769 = vmatprep.subr.mxu0 0.0
    %770 = vmatpush2.msra.mxu0 0.0
    %771 = vmatprep.subr.mxu0 0.0
    %772 = vmatpush2.msra.mxu0 0.0
    %773 = vmatprep.subr.mxu0 0.0
    %774 = vmatpush2.msra.mxu0 0.0
    %775 = vmatprep.subr.mxu0 0.0
    %776 = vmatpush2.msra.mxu0 0.0
    %777 = vmatprep.subr.mxu0 0.0
    %778 = vmatpush2.msra.mxu0 0.0
    %779 = vmatprep.subr.mxu0 0.0
    %780 = vmatpush2.msra.mxu0 0.0
    %781 = vmatprep.mubr.f32.mxu0 0.0
    %782 = vmatmul.mubr.f32.gmra.mxu0 %v640
    %v783 = vpop.f32.mrf.mxu0
    %v784 = vadd.f32 %v709, %v783
    %v785 = vpop.f32.mrf.mxu0
    %786 = vmatprep.mubr.f32.mxu0 0.0
    %787 = vmatmul.mubr.f32.gmra.mxu0 %v641
    %v788 = vpop.f32.mrf.mxu0
    %v789 = vadd.f32 %v714, %v788
    %v790 = vpop.f32.mrf.mxu0
    %791 = vdwg.mxu0
    %v792 = vadd.f32 %v784, %v314
    %v793 = vadd.f32 %v789, %v314
    %s794 = scalar_lea.vmem [#allocation12], 32
    %795 = vst [vmem:[%s794] sm:$0xff] %v792
    %796 = vst [vmem:[%s794 + $0x8] sm:$0xff] %v793
    %797 = vmatprep.subr.mxu0 0.0
    %798 = vmatpush1.msra.mxu0 %v154
    %799 = vmatprep.subr.mxu0 0.0
    %800 = vmatpush1.msra.mxu0 %v153
    %801 = vmatprep.subr.mxu0 0.0
    %802 = vmatpush1.msra.mxu0 %v152
    %803 = vmatprep.subr.mxu0 0.0
    %804 = vmatpush1.msra.mxu0 %v151
    %805 = vmatprep.subr.mxu0 0.0
    %806 = vmatpush1.msra.mxu0 %v150
    %807 = vmatprep.subr.mxu0 0.0
    %808 = vmatpush1.msra.mxu0 %v149
    %809 = vmatprep.subr.mxu0 0.0
    %810 = vmatpush1.msra.mxu0 %v148
    %811 = vmatprep.subr.mxu0 0.0
    %812 = vmatpush1.msra.mxu0 %v147
    %813 = vmatprep.subr.mxu0 0.0
    %814 = vmatpush1.msra.mxu0 %v146
    %815 = vmatprep.subr.mxu0 0.0
    %816 = vmatpush1.msra.mxu0 %v145
    %817 = vmatprep.subr.mxu0 0.0
    %818 = vmatpush1.msra.mxu0 %v144
    %819 = vmatprep.subr.mxu0 0.0
    %820 = vmatpush1.msra.mxu0 %v143
    %821 = vmatprep.subr.mxu0 0.0
    %822 = vmatpush1.msra.mxu0 %v142
    %823 = vmatprep.subr.mxu0 0.0
    %824 = vmatpush1.msra.mxu0 %v141
    %825 = vmatprep.subr.mxu0 0.0
    %826 = vmatpush1.msra.mxu0 %v140
    %827 = vmatprep.subr.mxu0 0.0
    %828 = vmatpush1.msra.mxu0 %v139
    %829 = vmatprep.subr.mxu0 0.0
    %830 = vmatpush2.msra.mxu0 0.0
    %831 = vmatprep.subr.mxu0 0.0
    %832 = vmatpush2.msra.mxu0 0.0
    %833 = vmatprep.subr.mxu0 0.0
    %834 = vmatpush2.msra.mxu0 0.0
    %835 = vmatprep.subr.mxu0 0.0
    %836 = vmatpush2.msra.mxu0 0.0
    %837 = vmatprep.subr.mxu0 0.0
    %838 = vmatpush2.msra.mxu0 0.0
    %839 = vmatprep.subr.mxu0 0.0
    %840 = vmatpush2.msra.mxu0 0.0
    %841 = vmatprep.subr.mxu0 0.0
    %842 = vmatpush2.msra.mxu0 0.0
    %843 = vmatprep.subr.mxu0 0.0
    %844 = vmatpush2.msra.mxu0 0.0
    %845 = vmatprep.subr.mxu0 0.0
    %846 = vmatpush2.msra.mxu0 0.0
    %847 = vmatprep.subr.mxu0 0.0
    %848 = vmatpush2.msra.mxu0 0.0
    %849 = vmatprep.subr.mxu0 0.0
    %850 = vmatpush2.msra.mxu0 0.0
    %851 = vmatprep.subr.mxu0 0.0
    %852 = vmatpush2.msra.mxu0 0.0
    %853 = vmatprep.subr.mxu0 0.0
    %854 = vmatpush2.msra.mxu0 0.0
    %855 = vmatprep.subr.mxu0 0.0
    %856 = vmatpush2.msra.mxu0 0.0
    %857 = vmatprep.subr.mxu0 0.0
    %858 = vmatpush2.msra.mxu0 0.0
    %859 = vmatprep.subr.mxu0 0.0
    %860 = vmatpush2.msra.mxu0 0.0
    %861 = vmatprep.mubr.f32.mxu0 0.0
    %862 = vmatmul.mubr.f32.gmra.mxu0 %v792
    %v863 = vpop.f32.mrf.mxu0
    %v864 = vadd.f32 %v324, %v863
    %v865 = vpop.f32.mrf.mxu0
    %866 = vmatprep.mubr.f32.mxu0 0.0
    %867 = vmatmul.mubr.f32.gmra.mxu0 %v793
    %v868 = vpop.f32.mrf.mxu0
    %v869 = vadd.f32 %v324, %v868
    %v870 = vpop.f32.mrf.mxu0
    %871 = vdwg.mxu0
    %s872 = scalar_lea.vmem [#allocation13], 32
    %873 = vst [vmem:[%s872] sm:$0xff] %v864
    %874 = vst [vmem:[%s872 + $0x8] sm:$0xff] %v869
    %s875 = scalar_lea.vmem [#allocation3], 48
    %v876 = vld [vmem:[%s875] sm:$0xff]
    %v877 = vld [vmem:[%s875 + $0x8] sm:$0xff]
    %878 = vmatprep.subr.mxu0 0.0
    %879 = vmatpush1.msra.mxu0 %v137
    %880 = vmatprep.subr.mxu0 0.0
    %881 = vmatpush1.msra.mxu0 %v136
    %882 = vmatprep.subr.mxu0 0.0
    %883 = vmatpush1.msra.mxu0 %v135
    %884 = vmatprep.subr.mxu0 0.0
    %885 = vmatpush1.msra.mxu0 %v134
    %886 = vmatprep.subr.mxu0 0.0
    %887 = vmatpush1.msra.mxu0 %v133
    %888 = vmatprep.subr.mxu0 0.0
    %889 = vmatpush1.msra.mxu0 %v132
    %890 = vmatprep.subr.mxu0 0.0
    %891 = vmatpush1.msra.mxu0 %v131
    %892 = vmatprep.subr.mxu0 0.0
    %893 = vmatpush1.msra.mxu0 %v130
    %894 = vmatprep.subr.mxu0 0.0
    %895 = vmatpush1.msra.mxu0 %v129
    %896 = vmatprep.subr.mxu0 0.0
    %897 = vmatpush1.msra.mxu0 %v128
    %898 = vmatprep.subr.mxu0 0.0
    %899 = vmatpush1.msra.mxu0 %v127
    %900 = vmatprep.subr.mxu0 0.0
    %901 = vmatpush1.msra.mxu0 %v126
    %902 = vmatprep.subr.mxu0 0.0
    %903 = vmatpush1.msra.mxu0 %v125
    %904 = vmatprep.subr.mxu0 0.0
    %905 = vmatpush1.msra.mxu0 %v124
    %906 = vmatprep.subr.mxu0 0.0
    %907 = vmatpush1.msra.mxu0 %v123
    %908 = vmatprep.subr.mxu0 0.0
    %909 = vmatpush1.msra.mxu0 %v122
    %910 = vmatprep.subr.mxu0 0.0
    %911 = vmatpush2.msra.mxu0 0.0
    %912 = vmatprep.subr.mxu0 0.0
    %913 = vmatpush2.msra.mxu0 0.0
    %914 = vmatprep.subr.mxu0 0.0
    %915 = vmatpush2.msra.mxu0 0.0
    %916 = vmatprep.subr.mxu0 0.0
    %917 = vmatpush2.msra.mxu0 0.0
    %918 = vmatprep.subr.mxu0 0.0
    %919 = vmatpush2.msra.mxu0 0.0
    %920 = vmatprep.subr.mxu0 0.0
    %921 = vmatpush2.msra.mxu0 0.0
    %922 = vmatprep.subr.mxu0 0.0
    %923 = vmatpush2.msra.mxu0 0.0
    %924 = vmatprep.subr.mxu0 0.0
    %925 = vmatpush2.msra.mxu0 0.0
    %926 = vmatprep.subr.mxu0 0.0
    %927 = vmatpush2.msra.mxu0 0.0
    %928 = vmatprep.subr.mxu0 0.0
    %929 = vmatpush2.msra.mxu0 0.0
    %930 = vmatprep.subr.mxu0 0.0
    %931 = vmatpush2.msra.mxu0 0.0
    %932 = vmatprep.subr.mxu0 0.0
    %933 = vmatpush2.msra.mxu0 0.0
    %934 = vmatprep.subr.mxu0 0.0
    %935 = vmatpush2.msra.mxu0 0.0
    %936 = vmatprep.subr.mxu0 0.0
    %937 = vmatpush2.msra.mxu0 0.0
    %938 = vmatprep.subr.mxu0 0.0
    %939 = vmatpush2.msra.mxu0 0.0
    %940 = vmatprep.subr.mxu0 0.0
    %941 = vmatpush2.msra.mxu0 0.0
    %942 = vmatprep.mubr.f32.mxu0 0.0
    %943 = vmatmul.mubr.f32.gmra.mxu0 %v792
    %v944 = vpop.f32.mrf.mxu0
    %v945 = vadd.f32 0.0, %v944
    %v946 = vpop.f32.mrf.mxu0
    %947 = vmatprep.mubr.f32.mxu0 0.0
    %948 = vmatmul.mubr.f32.gmra.mxu0 %v793
    %v949 = vpop.f32.mrf.mxu0
    %v950 = vadd.f32 0.0, %v949
    %v951 = vpop.f32.mrf.mxu0
    %952 = vdwg.mxu0
    %953 = vmatprep.subr.mxu0 0.0
    %954 = vmatpush1.msra.mxu0 %v121
    %955 = vmatprep.subr.mxu0 0.0
    %956 = vmatpush1.msra.mxu0 %v120
    %957 = vmatprep.subr.mxu0 0.0
    %958 = vmatpush1.msra.mxu0 %v119
    %959 = vmatprep.subr.mxu0 0.0
    %960 = vmatpush1.msra.mxu0 %v118
    %961 = vmatprep.subr.mxu0 0.0
    %962 = vmatpush1.msra.mxu0 %v117
    %963 = vmatprep.subr.mxu0 0.0
    %964 = vmatpush1.msra.mxu0 %v116
    %965 = vmatprep.subr.mxu0 0.0
    %966 = vmatpush1.msra.mxu0 %v115
    %967 = vmatprep.subr.mxu0 0.0
    %968 = vmatpush1.msra.mxu0 %v114
    %969 = vmatprep.subr.mxu0 0.0
    %970 = vmatpush1.msra.mxu0 %v113
    %971 = vmatprep.subr.mxu0 0.0
    %972 = vmatpush1.msra.mxu0 %v112
    %973 = vmatprep.subr.mxu0 0.0
    %974 = vmatpush1.msra.mxu0 %v111
    %975 = vmatprep.subr.mxu0 0.0
    %976 = vmatpush1.msra.mxu0 %v110
    %977 = vmatprep.subr.mxu0 0.0
    %978 = vmatpush1.msra.mxu0 %v109
    %979 = vmatprep.subr.mxu0 0.0
    %980 = vmatpush1.msra.mxu0 %v108
    %981 = vmatprep.subr.mxu0 0.0
    %982 = vmatpush1.msra.mxu0 %v107
    %983 = vmatprep.subr.mxu0 0.0
    %984 = vmatpush1.msra.mxu0 %v106
    %985 = vmatprep.subr.mxu0 0.0
    %986 = vmatpush2.msra.mxu0 0.0
    %987 = vmatprep.subr.mxu0 0.0
    %988 = vmatpush2.msra.mxu0 0.0
    %989 = vmatprep.subr.mxu0 0.0
    %990 = vmatpush2.msra.mxu0 0.0
    %991 = vmatprep.subr.mxu0 0.0
    %992 = vmatpush2.msra.mxu0 0.0
    %993 = vmatprep.subr.mxu0 0.0
    %994 = vmatpush2.msra.mxu0 0.0
    %995 = vmatprep.subr.mxu0 0.0
    %996 = vmatpush2.msra.mxu0 0.0
    %997 = vmatprep.subr.mxu0 0.0
    %998 = vmatpush2.msra.mxu0 0.0
    %999 = vmatprep.subr.mxu0 0.0
    %1000 = vmatpush2.msra.mxu0 0.0
    %1001 = vmatprep.subr.mxu0 0.0
    %1002 = vmatpush2.msra.mxu0 0.0
    %1003 = vmatprep.subr.mxu0 0.0
    %1004 = vmatpush2.msra.mxu0 0.0
    %1005 = vmatprep.subr.mxu0 0.0
    %1006 = vmatpush2.msra.mxu0 0.0
    %1007 = vmatprep.subr.mxu0 0.0
    %1008 = vmatpush2.msra.mxu0 0.0
    %1009 = vmatprep.subr.mxu0 0.0
    %1010 = vmatpush2.msra.mxu0 0.0
    %1011 = vmatprep.subr.mxu0 0.0
    %1012 = vmatpush2.msra.mxu0 0.0
    %1013 = vmatprep.subr.mxu0 0.0
    %1014 = vmatpush2.msra.mxu0 0.0
    %1015 = vmatprep.subr.mxu0 0.0
    %1016 = vmatpush2.msra.mxu0 0.0
    %1017 = vmatprep.mubr.f32.mxu0 0.0
    %1018 = vmatmul.mubr.f32.gmra.mxu0 %v876
    %v1019 = vpop.f32.mrf.mxu0
    %v1020 = vadd.f32 %v945, %v1019
    %v1021 = vpop.f32.mrf.mxu0
    %1022 = vmatprep.mubr.f32.mxu0 0.0
    %1023 = vmatmul.mubr.f32.gmra.mxu0 %v877
    %v1024 = vpop.f32.mrf.mxu0
    %v1025 = vadd.f32 %v950, %v1024
    %v1026 = vpop.f32.mrf.mxu0
    %1027 = vdwg.mxu0
    %v1028 = vadd.f32 %v1020, %v314
    %v1029 = vadd.f32 %v1025, %v314
    %s1030 = scalar_lea.vmem [#allocation12], 48
    %1031 = vst [vmem:[%s1030] sm:$0xff] %v1028
    %1032 = vst [vmem:[%s1030 + $0x8] sm:$0xff] %v1029
    %1033 = vmatprep.subr.mxu0 0.0
    %1034 = vmatpush1.msra.mxu0 %v154
    %1035 = vmatprep.subr.mxu0 0.0
    %1036 = vmatpush1.msra.mxu0 %v153
    %1037 = vmatprep.subr.mxu0 0.0
    %1038 = vmatpush1.msra.mxu0 %v152
    %1039 = vmatprep.subr.mxu0 0.0
    %1040 = vmatpush1.msra.mxu0 %v151
    %1041 = vmatprep.subr.mxu0 0.0
    %1042 = vmatpush1.msra.mxu0 %v150
    %1043 = vmatprep.subr.mxu0 0.0
    %1044 = vmatpush1.msra.mxu0 %v149
    %1045 = vmatprep.subr.mxu0 0.0
    %1046 = vmatpush1.msra.mxu0 %v148
    %1047 = vmatprep.subr.mxu0 0.0
    %1048 = vmatpush1.msra.mxu0 %v147
    %1049 = vmatprep.subr.mxu0 0.0
    %1050 = vmatpush1.msra.mxu0 %v146
    %1051 = vmatprep.subr.mxu0 0.0
    %1052 = vmatpush1.msra.mxu0 %v145
    %1053 = vmatprep.subr.mxu0 0.0
    %1054 = vmatpush1.msra.mxu0 %v144
    %1055 = vmatprep.subr.mxu0 0.0
    %1056 = vmatpush1.msra.mxu0 %v143
    %1057 = vmatprep.subr.mxu0 0.0
    %1058 = vmatpush1.msra.mxu0 %v142
    %1059 = vmatprep.subr.mxu0 0.0
    %1060 = vmatpush1.msra.mxu0 %v141
    %1061 = vmatprep.subr.mxu0 0.0
    %1062 = vmatpush1.msra.mxu0 %v140
    %1063 = vmatprep.subr.mxu0 0.0
    %1064 = vmatpush1.msra.mxu0 %v139
    %1065 = vmatprep.subr.mxu0 0.0
    %1066 = vmatpush2.msra.mxu0 0.0
    %1067 = vmatprep.subr.mxu0 0.0
    %1068 = vmatpush2.msra.mxu0 0.0
    %1069 = vmatprep.subr.mxu0 0.0
    %1070 = vmatpush2.msra.mxu0 0.0
    %1071 = vmatprep.subr.mxu0 0.0
    %1072 = vmatpush2.msra.mxu0 0.0
    %1073 = vmatprep.subr.mxu0 0.0
    %1074 = vmatpush2.msra.mxu0 0.0
    %1075 = vmatprep.subr.mxu0 0.0
    %1076 = vmatpush2.msra.mxu0 0.0
    %1077 = vmatprep.subr.mxu0 0.0
    %1078 = vmatpush2.msra.mxu0 0.0
    %1079 = vmatprep.subr.mxu0 0.0
    %1080 = vmatpush2.msra.mxu0 0.0
    %1081 = vmatprep.subr.mxu0 0.0
    %1082 = vmatpush2.msra.mxu0 0.0
    %1083 = vmatprep.subr.mxu0 0.0
    %1084 = vmatpush2.msra.mxu0 0.0
    %1085 = vmatprep.subr.mxu0 0.0
    %1086 = vmatpush2.msra.mxu0 0.0
    %1087 = vmatprep.subr.mxu0 0.0
    %1088 = vmatpush2.msra.mxu0 0.0
    %1089 = vmatprep.subr.mxu0 0.0
    %1090 = vmatpush2.msra.mxu0 0.0
    %1091 = vmatprep.subr.mxu0 0.0
    %1092 = vmatpush2.msra.mxu0 0.0
    %1093 = vmatprep.subr.mxu0 0.0
    %1094 = vmatpush2.msra.mxu0 0.0
    %1095 = vmatprep.subr.mxu0 0.0
    %1096 = vmatpush2.msra.mxu0 0.0
    %1097 = vmatprep.mubr.f32.mxu0 0.0
    %1098 = vmatmul.mubr.f32.gmra.mxu0 %v1028
    %v1099 = vpop.f32.mrf.mxu0
    %v1100 = vadd.f32 %v324, %v1099
    %v1101 = vpop.f32.mrf.mxu0
    %1102 = vmatprep.mubr.f32.mxu0 0.0
    %1103 = vmatmul.mubr.f32.gmra.mxu0 %v1029
    %v1104 = vpop.f32.mrf.mxu0
    %v1105 = vadd.f32 %v324, %v1104
    %v1106 = vpop.f32.mrf.mxu0
    %1107 = vdwg.mxu0
    %s1108 = scalar_lea.vmem [#allocation13], 48
    %1109 = vst [vmem:[%s1108] sm:$0xff] %v1100
    %1110 = vst [vmem:[%s1108 + $0x8] sm:$0xff] %v1105
    %s1111 = scalar_lea.vmem [#allocation3], 64
    %v1112 = vld [vmem:[%s1111] sm:$0xff]
    %v1113 = vld [vmem:[%s1111 + $0x8] sm:$0xff]
    %1114 = vmatprep.subr.mxu0 0.0
    %1115 = vmatpush1.msra.mxu0 %v137
    %1116 = vmatprep.subr.mxu0 0.0
    %1117 = vmatpush1.msra.mxu0 %v136
    %1118 = vmatprep.subr.mxu0 0.0
    %1119 = vmatpush1.msra.mxu0 %v135
    %1120 = vmatprep.subr.mxu0 0.0
    %1121 = vmatpush1.msra.mxu0 %v134
    %1122 = vmatprep.subr.mxu0 0.0
    %1123 = vmatpush1.msra.mxu0 %v133
    %1124 = vmatprep.subr.mxu0 0.0
    %1125 = vmatpush1.msra.mxu0 %v132
    %1126 = vmatprep.subr.mxu0 0.0
    %1127 = vmatpush1.msra.mxu0 %v131
    %1128 = vmatprep.subr.mxu0 0.0
    %1129 = vmatpush1.msra.mxu0 %v130
    %1130 = vmatprep.subr.mxu0 0.0
    %1131 = vmatpush1.msra.mxu0 %v129
    %1132 = vmatprep.subr.mxu0 0.0
    %1133 = vmatpush1.msra.mxu0 %v128
    %1134 = vmatprep.subr.mxu0 0.0
    %1135 = vmatpush1.msra.mxu0 %v127
    %1136 = vmatprep.subr.mxu0 0.0
    %1137 = vmatpush1.msra.mxu0 %v126
    %1138 = vmatprep.subr.mxu0 0.0
    %1139 = vmatpush1.msra.mxu0 %v125
    %1140 = vmatprep.subr.mxu0 0.0
    %1141 = vmatpush1.msra.mxu0 %v124
    %1142 = vmatprep.subr.mxu0 0.0
    %1143 = vmatpush1.msra.mxu0 %v123
    %1144 = vmatprep.subr.mxu0 0.0
    %1145 = vmatpush1.msra.mxu0 %v122
    %1146 = vmatprep.subr.mxu0 0.0
    %1147 = vmatpush2.msra.mxu0 0.0
    %1148 = vmatprep.subr.mxu0 0.0
    %1149 = vmatpush2.msra.mxu0 0.0
    %1150 = vmatprep.subr.mxu0 0.0
    %1151 = vmatpush2.msra.mxu0 0.0
    %1152 = vmatprep.subr.mxu0 0.0
    %1153 = vmatpush2.msra.mxu0 0.0
    %1154 = vmatprep.subr.mxu0 0.0
    %1155 = vmatpush2.msra.mxu0 0.0
    %1156 = vmatprep.subr.mxu0 0.0
    %1157 = vmatpush2.msra.mxu0 0.0
    %1158 = vmatprep.subr.mxu0 0.0
    %1159 = vmatpush2.msra.mxu0 0.0
    %1160 = vmatprep.subr.mxu0 0.0
    %1161 = vmatpush2.msra.mxu0 0.0
    %1162 = vmatprep.subr.mxu0 0.0
    %1163 = vmatpush2.msra.mxu0 0.0
    %1164 = vmatprep.subr.mxu0 0.0
    %1165 = vmatpush2.msra.mxu0 0.0
    %1166 = vmatprep.subr.mxu0 0.0
    %1167 = vmatpush2.msra.mxu0 0.0
    %1168 = vmatprep.subr.mxu0 0.0
    %1169 = vmatpush2.msra.mxu0 0.0
    %1170 = vmatprep.subr.mxu0 0.0
    %1171 = vmatpush2.msra.mxu0 0.0
    %1172 = vmatprep.subr.mxu0 0.0
    %1173 = vmatpush2.msra.mxu0 0.0
    %1174 = vmatprep.subr.mxu0 0.0
    %1175 = vmatpush2.msra.mxu0 0.0
    %1176 = vmatprep.subr.mxu0 0.0
    %1177 = vmatpush2.msra.mxu0 0.0
    %1178 = vmatprep.mubr.f32.mxu0 0.0
    %1179 = vmatmul.mubr.f32.gmra.mxu0 %v1028
    %v1180 = vpop.f32.mrf.mxu0
    %v1181 = vadd.f32 0.0, %v1180
    %v1182 = vpop.f32.mrf.mxu0
    %1183 = vmatprep.mubr.f32.mxu0 0.0
    %1184 = vmatmul.mubr.f32.gmra.mxu0 %v1029
    %v1185 = vpop.f32.mrf.mxu0
    %v1186 = vadd.f32 0.0, %v1185
    %v1187 = vpop.f32.mrf.mxu0
    %1188 = vdwg.mxu0
    %1189 = vmatprep.subr.mxu0 0.0
    %1190 = vmatpush1.msra.mxu0 %v121
    %1191 = vmatprep.subr.mxu0 0.0
    %1192 = vmatpush1.msra.mxu0 %v120
    %1193 = vmatprep.subr.mxu0 0.0
    %1194 = vmatpush1.msra.mxu0 %v119
    %1195 = vmatprep.subr.mxu0 0.0
    %1196 = vmatpush1.msra.mxu0 %v118
    %1197 = vmatprep.subr.mxu0 0.0
    %1198 = vmatpush1.msra.mxu0 %v117
    %1199 = vmatprep.subr.mxu0 0.0
    %1200 = vmatpush1.msra.mxu0 %v116
    %1201 = vmatprep.subr.mxu0 0.0
    %1202 = vmatpush1.msra.mxu0 %v115
    %1203 = vmatprep.subr.mxu0 0.0
    %1204 = vmatpush1.msra.mxu0 %v114
    %1205 = vmatprep.subr.mxu0 0.0
    %1206 = vmatpush1.msra.mxu0 %v113
    %1207 = vmatprep.subr.mxu0 0.0
    %1208 = vmatpush1.msra.mxu0 %v112
    %1209 = vmatprep.subr.mxu0 0.0
    %1210 = vmatpush1.msra.mxu0 %v111
    %1211 = vmatprep.subr.mxu0 0.0
    %1212 = vmatpush1.msra.mxu0 %v110
    %1213 = vmatprep.subr.mxu0 0.0
    %1214 = vmatpush1.msra.mxu0 %v109
    %1215 = vmatprep.subr.mxu0 0.0
    %1216 = vmatpush1.msra.mxu0 %v108
    %1217 = vmatprep.subr.mxu0 0.0
    %1218 = vmatpush1.msra.mxu0 %v107
    %1219 = vmatprep.subr.mxu0 0.0
    %1220 = vmatpush1.msra.mxu0 %v106
    %1221 = vmatprep.subr.mxu0 0.0
    %1222 = vmatpush2.msra.mxu0 0.0
    %1223 = vmatprep.subr.mxu0 0.0
    %1224 = vmatpush2.msra.mxu0 0.0
    %1225 = vmatprep.subr.mxu0 0.0
    %1226 = vmatpush2.msra.mxu0 0.0
    %1227 = vmatprep.subr.mxu0 0.0
    %1228 = vmatpush2.msra.mxu0 0.0
    %1229 = vmatprep.subr.mxu0 0.0
    %1230 = vmatpush2.msra.mxu0 0.0
    %1231 = vmatprep.subr.mxu0 0.0
    %1232 = vmatpush2.msra.mxu0 0.0
    %1233 = vmatprep.subr.mxu0 0.0
    %1234 = vmatpush2.msra.mxu0 0.0
    %1235 = vmatprep.subr.mxu0 0.0
    %1236 = vmatpush2.msra.mxu0 0.0
    %1237 = vmatprep.subr.mxu0 0.0
    %1238 = vmatpush2.msra.mxu0 0.0
    %1239 = vmatprep.subr.mxu0 0.0
    %1240 = vmatpush2.msra.mxu0 0.0
    %1241 = vmatprep.subr.mxu0 0.0
    %1242 = vmatpush2.msra.mxu0 0.0
    %1243 = vmatprep.subr.mxu0 0.0
    %1244 = vmatpush2.msra.mxu0 0.0
    %1245 = vmatprep.subr.mxu0 0.0
    %1246 = vmatpush2.msra.mxu0 0.0
    %1247 = vmatprep.subr.mxu0 0.0
    %1248 = vmatpush2.msra.mxu0 0.0
    %1249 = vmatprep.subr.mxu0 0.0
    %1250 = vmatpush2.msra.mxu0 0.0
    %1251 = vmatprep.subr.mxu0 0.0
    %1252 = vmatpush2.msra.mxu0 0.0
    %1253 = vmatprep.mubr.f32.mxu0 0.0
    %1254 = vmatmul.mubr.f32.gmra.mxu0 %v1112
    %v1255 = vpop.f32.mrf.mxu0
    %v1256 = vadd.f32 %v1181, %v1255
    %v1257 = vpop.f32.mrf.mxu0
    %1258 = vmatprep.mubr.f32.mxu0 0.0
    %1259 = vmatmul.mubr.f32.gmra.mxu0 %v1113
    %v1260 = vpop.f32.mrf.mxu0
    %v1261 = vadd.f32 %v1186, %v1260
    %v1262 = vpop.f32.mrf.mxu0
    %1263 = vdwg.mxu0
    %v1264 = vadd.f32 %v1256, %v314
    %v1265 = vadd.f32 %v1261, %v314
    %s1266 = scalar_lea.vmem [#allocation12], 64
    %1267 = vst [vmem:[%s1266] sm:$0xff] %v1264
    %1268 = vst [vmem:[%s1266 + $0x8] sm:$0xff] %v1265
    %1269 = vmatprep.subr.mxu0 0.0
    %1270 = vmatpush1.msra.mxu0 %v154
    %1271 = vmatprep.subr.mxu0 0.0
    %1272 = vmatpush1.msra.mxu0 %v153
    %1273 = vmatprep.subr.mxu0 0.0
    %1274 = vmatpush1.msra.mxu0 %v152
    %1275 = vmatprep.subr.mxu0 0.0
    %1276 = vmatpush1.msra.mxu0 %v151
    %1277 = vmatprep.subr.mxu0 0.0
    %1278 = vmatpush1.msra.mxu0 %v150
    %1279 = vmatprep.subr.mxu0 0.0
    %1280 = vmatpush1.msra.mxu0 %v149
    %1281 = vmatprep.subr.mxu0 0.0
    %1282 = vmatpush1.msra.mxu0 %v148
    %1283 = vmatprep.subr.mxu0 0.0
    %1284 = vmatpush1.msra.mxu0 %v147
    %1285 = vmatprep.subr.mxu0 0.0
    %1286 = vmatpush1.msra.mxu0 %v146
    %1287 = vmatprep.subr.mxu0 0.0
    %1288 = vmatpush1.msra.mxu0 %v145
    %1289 = vmatprep.subr.mxu0 0.0
    %1290 = vmatpush1.msra.mxu0 %v144
    %1291 = vmatprep.subr.mxu0 0.0
    %1292 = vmatpush1.msra.mxu0 %v143
    %1293 = vmatprep.subr.mxu0 0.0
    %1294 = vmatpush1.msra.mxu0 %v142
    %1295 = vmatprep.subr.mxu0 0.0
    %1296 = vmatpush1.msra.mxu0 %v141
    %1297 = vmatprep.subr.mxu0 0.0
    %1298 = vmatpush1.msra.mxu0 %v140
    %1299 = vmatprep.subr.mxu0 0.0
    %1300 = vmatpush1.msra.mxu0 %v139
    %1301 = vmatprep.subr.mxu0 0.0
    %1302 = vmatpush2.msra.mxu0 0.0
    %1303 = vmatprep.subr.mxu0 0.0
    %1304 = vmatpush2.msra.mxu0 0.0
    %1305 = vmatprep.subr.mxu0 0.0
    %1306 = vmatpush2.msra.mxu0 0.0
    %1307 = vmatprep.subr.mxu0 0.0
    %1308 = vmatpush2.msra.mxu0 0.0
    %1309 = vmatprep.subr.mxu0 0.0
    %1310 = vmatpush2.msra.mxu0 0.0
    %1311 = vmatprep.subr.mxu0 0.0
    %1312 = vmatpush2.msra.mxu0 0.0
    %1313 = vmatprep.subr.mxu0 0.0
    %1314 = vmatpush2.msra.mxu0 0.0
    %1315 = vmatprep.subr.mxu0 0.0
    %1316 = vmatpush2.msra.mxu0 0.0
    %1317 = vmatprep.subr.mxu0 0.0
    %1318 = vmatpush2.msra.mxu0 0.0
    %1319 = vmatprep.subr.mxu0 0.0
    %1320 = vmatpush2.msra.mxu0 0.0
    %1321 = vmatprep.subr.mxu0 0.0
    %1322 = vmatpush2.msra.mxu0 0.0
    %1323 = vmatprep.subr.mxu0 0.0
    %1324 = vmatpush2.msra.mxu0 0.0
    %1325 = vmatprep.subr.mxu0 0.0
    %1326 = vmatpush2.msra.mxu0 0.0
    %1327 = vmatprep.subr.mxu0 0.0
    %1328 = vmatpush2.msra.mxu0 0.0
    %1329 = vmatprep.subr.mxu0 0.0
    %1330 = vmatpush2.msra.mxu0 0.0
    %1331 = vmatprep.subr.mxu0 0.0
    %1332 = vmatpush2.msra.mxu0 0.0
    %1333 = vmatprep.mubr.f32.mxu0 0.0
    %1334 = vmatmul.mubr.f32.gmra.mxu0 %v1264
    %v1335 = vpop.f32.mrf.mxu0
    %v1336 = vadd.f32 %v324, %v1335
    %v1337 = vpop.f32.mrf.mxu0
    %1338 = vmatprep.mubr.f32.mxu0 0.0
    %1339 = vmatmul.mubr.f32.gmra.mxu0 %v1265
    %v1340 = vpop.f32.mrf.mxu0
    %v1341 = vadd.f32 %v324, %v1340
    %v1342 = vpop.f32.mrf.mxu0
    %1343 = vdwg.mxu0
    %s1344 = scalar_lea.vmem [#allocation13], 64
    %1345 = vst [vmem:[%s1344] sm:$0xff] %v1336
    %1346 = vst [vmem:[%s1344 + $0x8] sm:$0xff] %v1341
    %s1347 = scalar_lea.vmem [#allocation3], 80
    %v1348 = vld [vmem:[%s1347] sm:$0xff]
    %v1349 = vld [vmem:[%s1347 + $0x8] sm:$0xff]
    %1350 = vmatprep.subr.mxu0 0.0
    %1351 = vmatpush1.msra.mxu0 %v137
    %1352 = vmatprep.subr.mxu0 0.0
    %1353 = vmatpush1.msra.mxu0 %v136
    %1354 = vmatprep.subr.mxu0 0.0
    %1355 = vmatpush1.msra.mxu0 %v135
    %1356 = vmatprep.subr.mxu0 0.0
    %1357 = vmatpush1.msra.mxu0 %v134
    %1358 = vmatprep.subr.mxu0 0.0
    %1359 = vmatpush1.msra.mxu0 %v133
    %1360 = vmatprep.subr.mxu0 0.0
    %1361 = vmatpush1.msra.mxu0 %v132
    %1362 = vmatprep.subr.mxu0 0.0
    %1363 = vmatpush1.msra.mxu0 %v131
    %1364 = vmatprep.subr.mxu0 0.0
    %1365 = vmatpush1.msra.mxu0 %v130
    %1366 = vmatprep.subr.mxu0 0.0
    %1367 = vmatpush1.msra.mxu0 %v129
    %1368 = vmatprep.subr.mxu0 0.0
    %1369 = vmatpush1.msra.mxu0 %v128
    %1370 = vmatprep.subr.mxu0 0.0
    %1371 = vmatpush1.msra.mxu0 %v127
    %1372 = vmatprep.subr.mxu0 0.0
    %1373 = vmatpush1.msra.mxu0 %v126
    %1374 = vmatprep.subr.mxu0 0.0
    %1375 = vmatpush1.msra.mxu0 %v125
    %1376 = vmatprep.subr.mxu0 0.0
    %1377 = vmatpush1.msra.mxu0 %v124
    %1378 = vmatprep.subr.mxu0 0.0
    %1379 = vmatpush1.msra.mxu0 %v123
    %1380 = vmatprep.subr.mxu0 0.0
    %1381 = vmatpush1.msra.mxu0 %v122
    %1382 = vmatprep.subr.mxu0 0.0
    %1383 = vmatpush2.msra.mxu0 0.0
    %1384 = vmatprep.subr.mxu0 0.0
    %1385 = vmatpush2.msra.mxu0 0.0
    %1386 = vmatprep.subr.mxu0 0.0
    %1387 = vmatpush2.msra.mxu0 0.0
    %1388 = vmatprep.subr.mxu0 0.0
    %1389 = vmatpush2.msra.mxu0 0.0
    %1390 = vmatprep.subr.mxu0 0.0
    %1391 = vmatpush2.msra.mxu0 0.0
    %1392 = vmatprep.subr.mxu0 0.0
    %1393 = vmatpush2.msra.mxu0 0.0
    %1394 = vmatprep.subr.mxu0 0.0
    %1395 = vmatpush2.msra.mxu0 0.0
    %1396 = vmatprep.subr.mxu0 0.0
    %1397 = vmatpush2.msra.mxu0 0.0
    %1398 = vmatprep.subr.mxu0 0.0
    %1399 = vmatpush2.msra.mxu0 0.0
    %1400 = vmatprep.subr.mxu0 0.0
    %1401 = vmatpush2.msra.mxu0 0.0
    %1402 = vmatprep.subr.mxu0 0.0
    %1403 = vmatpush2.msra.mxu0 0.0
    %1404 = vmatprep.subr.mxu0 0.0
    %1405 = vmatpush2.msra.mxu0 0.0
    %1406 = vmatprep.subr.mxu0 0.0
    %1407 = vmatpush2.msra.mxu0 0.0
    %1408 = vmatprep.subr.mxu0 0.0
    %1409 = vmatpush2.msra.mxu0 0.0
    %1410 = vmatprep.subr.mxu0 0.0
    %1411 = vmatpush2.msra.mxu0 0.0
    %1412 = vmatprep.subr.mxu0 0.0
    %1413 = vmatpush2.msra.mxu0 0.0
    %1414 = vmatprep.mubr.f32.mxu0 0.0
    %1415 = vmatmul.mubr.f32.gmra.mxu0 %v1264
    %v1416 = vpop.f32.mrf.mxu0
    %v1417 = vadd.f32 0.0, %v1416
    %v1418 = vpop.f32.mrf.mxu0
    %1419 = vmatprep.mubr.f32.mxu0 0.0
    %1420 = vmatmul.mubr.f32.gmra.mxu0 %v1265
    %v1421 = vpop.f32.mrf.mxu0
    %v1422 = vadd.f32 0.0, %v1421
    %v1423 = vpop.f32.mrf.mxu0
    %1424 = vdwg.mxu0
    %1425 = vmatprep.subr.mxu0 0.0
    %1426 = vmatpush1.msra.mxu0 %v121
    %1427 = vmatprep.subr.mxu0 0.0
    %1428 = vmatpush1.msra.mxu0 %v120
    %1429 = vmatprep.subr.mxu0 0.0
    %1430 = vmatpush1.msra.mxu0 %v119
    %1431 = vmatprep.subr.mxu0 0.0
    %1432 = vmatpush1.msra.mxu0 %v118
    %1433 = vmatprep.subr.mxu0 0.0
    %1434 = vmatpush1.msra.mxu0 %v117
    %1435 = vmatprep.subr.mxu0 0.0
    %1436 = vmatpush1.msra.mxu0 %v116
    %1437 = vmatprep.subr.mxu0 0.0
    %1438 = vmatpush1.msra.mxu0 %v115
    %1439 = vmatprep.subr.mxu0 0.0
    %1440 = vmatpush1.msra.mxu0 %v114
    %1441 = vmatprep.subr.mxu0 0.0
    %1442 = vmatpush1.msra.mxu0 %v113
    %1443 = vmatprep.subr.mxu0 0.0
    %1444 = vmatpush1.msra.mxu0 %v112
    %1445 = vmatprep.subr.mxu0 0.0
    %1446 = vmatpush1.msra.mxu0 %v111
    %1447 = vmatprep.subr.mxu0 0.0
    %1448 = vmatpush1.msra.mxu0 %v110
    %1449 = vmatprep.subr.mxu0 0.0
    %1450 = vmatpush1.msra.mxu0 %v109
    %1451 = vmatprep.subr.mxu0 0.0
    %1452 = vmatpush1.msra.mxu0 %v108
    %1453 = vmatprep.subr.mxu0 0.0
    %1454 = vmatpush1.msra.mxu0 %v107
    %1455 = vmatprep.subr.mxu0 0.0
    %1456 = vmatpush1.msra.mxu0 %v106
    %1457 = vmatprep.subr.mxu0 0.0
    %1458 = vmatpush2.msra.mxu0 0.0
    %1459 = vmatprep.subr.mxu0 0.0
    %1460 = vmatpush2.msra.mxu0 0.0
    %1461 = vmatprep.subr.mxu0 0.0
    %1462 = vmatpush2.msra.mxu0 0.0
    %1463 = vmatprep.subr.mxu0 0.0
    %1464 = vmatpush2.msra.mxu0 0.0
    %1465 = vmatprep.subr.mxu0 0.0
    %1466 = vmatpush2.msra.mxu0 0.0
    %1467 = vmatprep.subr.mxu0 0.0
    %1468 = vmatpush2.msra.mxu0 0.0
    %1469 = vmatprep.subr.mxu0 0.0
    %1470 = vmatpush2.msra.mxu0 0.0
    %1471 = vmatprep.subr.mxu0 0.0
    %1472 = vmatpush2.msra.mxu0 0.0
    %1473 = vmatprep.subr.mxu0 0.0
    %1474 = vmatpush2.msra.mxu0 0.0
    %1475 = vmatprep.subr.mxu0 0.0
    %1476 = vmatpush2.msra.mxu0 0.0
    %1477 = vmatprep.subr.mxu0 0.0
    %1478 = vmatpush2.msra.mxu0 0.0
    %1479 = vmatprep.subr.mxu0 0.0
    %1480 = vmatpush2.msra.mxu0 0.0
    %1481 = vmatprep.subr.mxu0 0.0
    %1482 = vmatpush2.msra.mxu0 0.0
    %1483 = vmatprep.subr.mxu0 0.0
    %1484 = vmatpush2.msra.mxu0 0.0
    %1485 = vmatprep.subr.mxu0 0.0
    %1486 = vmatpush2.msra.mxu0 0.0
    %1487 = vmatprep.subr.mxu0 0.0
    %1488 = vmatpush2.msra.mxu0 0.0
    %1489 = vmatprep.mubr.f32.mxu0 0.0
    %1490 = vmatmul.mubr.f32.gmra.mxu0 %v1348
    %v1491 = vpop.f32.mrf.mxu0
    %v1492 = vadd.f32 %v1417, %v1491
    %v1493 = vpop.f32.mrf.mxu0
    %1494 = vmatprep.mubr.f32.mxu0 0.0
    %1495 = vmatmul.mubr.f32.gmra.mxu0 %v1349
    %v1496 = vpop.f32.mrf.mxu0
    %v1497 = vadd.f32 %v1422, %v1496
    %v1498 = vpop.f32.mrf.mxu0
    %1499 = vdwg.mxu0
    %v1500 = vadd.f32 %v1492, %v314
    %v1501 = vadd.f32 %v1497, %v314
    %s1502 = scalar_lea.vmem [#allocation12], 80
    %1503 = vst [vmem:[%s1502] sm:$0xff] %v1500
    %1504 = vst [vmem:[%s1502 + $0x8] sm:$0xff] %v1501
    %1505 = vmatprep.subr.mxu0 0.0
    %1506 = vmatpush1.msra.mxu0 %v154
    %1507 = vmatprep.subr.mxu0 0.0
    %1508 = vmatpush1.msra.mxu0 %v153
    %1509 = vmatprep.subr.mxu0 0.0
    %1510 = vmatpush1.msra.mxu0 %v152
    %1511 = vmatprep.subr.mxu0 0.0
    %1512 = vmatpush1.msra.mxu0 %v151
    %1513 = vmatprep.subr.mxu0 0.0
    %1514 = vmatpush1.msra.mxu0 %v150
    %1515 = vmatprep.subr.mxu0 0.0
    %1516 = vmatpush1.msra.mxu0 %v149
    %1517 = vmatprep.subr.mxu0 0.0
    %1518 = vmatpush1.msra.mxu0 %v148
    %1519 = vmatprep.subr.mxu0 0.0
    %1520 = vmatpush1.msra.mxu0 %v147
    %1521 = vmatprep.subr.mxu0 0.0
    %1522 = vmatpush1.msra.mxu0 %v146
    %1523 = vmatprep.subr.mxu0 0.0
    %1524 = vmatpush1.msra.mxu0 %v145
    %1525 = vmatprep.subr.mxu0 0.0
    %1526 = vmatpush1.msra.mxu0 %v144
    %1527 = vmatprep.subr.mxu0 0.0
    %1528 = vmatpush1.msra.mxu0 %v143
    %1529 = vmatprep.subr.mxu0 0.0
    %1530 = vmatpush1.msra.mxu0 %v142
    %1531 = vmatprep.subr.mxu0 0.0
    %1532 = vmatpush1.msra.mxu0 %v141
    %1533 = vmatprep.subr.mxu0 0.0
    %1534 = vmatpush1.msra.mxu0 %v140
    %1535 = vmatprep.subr.mxu0 0.0
    %1536 = vmatpush1.msra.mxu0 %v139
    %1537 = vmatprep.subr.mxu0 0.0
    %1538 = vmatpush2.msra.mxu0 0.0
    %1539 = vmatprep.subr.mxu0 0.0
    %1540 = vmatpush2.msra.mxu0 0.0
    %1541 = vmatprep.subr.mxu0 0.0
    %1542 = vmatpush2.msra.mxu0 0.0
    %1543 = vmatprep.subr.mxu0 0.0
    %1544 = vmatpush2.msra.mxu0 0.0
    %1545 = vmatprep.subr.mxu0 0.0
    %1546 = vmatpush2.msra.mxu0 0.0
    %1547 = vmatprep.subr.mxu0 0.0
    %1548 = vmatpush2.msra.mxu0 0.0
    %1549 = vmatprep.subr.mxu0 0.0
    %1550 = vmatpush2.msra.mxu0 0.0
    %1551 = vmatprep.subr.mxu0 0.0
    %1552 = vmatpush2.msra.mxu0 0.0
    %1553 = vmatprep.subr.mxu0 0.0
    %1554 = vmatpush2.msra.mxu0 0.0
    %1555 = vmatprep.subr.mxu0 0.0
    %1556 = vmatpush2.msra.mxu0 0.0
    %1557 = vmatprep.subr.mxu0 0.0
    %1558 = vmatpush2.msra.mxu0 0.0
    %1559 = vmatprep.subr.mxu0 0.0
    %1560 = vmatpush2.msra.mxu0 0.0
    %1561 = vmatprep.subr.mxu0 0.0
    %1562 = vmatpush2.msra.mxu0 0.0
    %1563 = vmatprep.subr.mxu0 0.0
    %1564 = vmatpush2.msra.mxu0 0.0
    %1565 = vmatprep.subr.mxu0 0.0
    %1566 = vmatpush2.msra.mxu0 0.0
    %1567 = vmatprep.subr.mxu0 0.0
    %1568 = vmatpush2.msra.mxu0 0.0
    %1569 = vmatprep.mubr.f32.mxu0 0.0
    %1570 = vmatmul.mubr.f32.gmra.mxu0 %v1500
    %v1571 = vpop.f32.mrf.mxu0
    %v1572 = vadd.f32 %v324, %v1571
    %v1573 = vpop.f32.mrf.mxu0
    %1574 = vmatprep.mubr.f32.mxu0 0.0
    %1575 = vmatmul.mubr.f32.gmra.mxu0 %v1501
    %v1576 = vpop.f32.mrf.mxu0
    %v1577 = vadd.f32 %v324, %v1576
    %v1578 = vpop.f32.mrf.mxu0
    %1579 = vdwg.mxu0
    %s1580 = scalar_lea.vmem [#allocation13], 80
    %1581 = vst [vmem:[%s1580] sm:$0xff] %v1572
    %1582 = vst [vmem:[%s1580 + $0x8] sm:$0xff] %v1577
    %1583 = vst [vmem:[#allocation2] sm:$0xff] %v1500
    %1584 = vst [vmem:[#allocation2 + $0x8] sm:$0xff] %v1501
    // Predicated region
    $region54: #{tpu_custom_call.1} parent=1 // pred_check
      _
    $region55: #{tpu_custom_call.1} parent=1 // pred_check_branch
      %1586 = sbr.rel (0) target = $region57
    $region56: #{tpu_custom_call.1} parent=1 // pred_region
      %s1588 = ssub.s32 1536, 1536
      %1589 = vsyncadd [#allocation5], %s1588
      %s1590 = sshll.u32 [#allocation12], 4
      %s1591 = int_to_ptr.vmem [resolvable:$true] %s1590
      %1596 = dma.vmem_to_hbm [thread:$0]  %s1591, 1536, %s7, [#allocation5], 128, 128, 8
    $region57: #{tpu_custom_call.1} parent=1 // pred_fallthru
      _
    // Predicated region
    $region58: #{tpu_custom_call.1} parent=1 // pred_check
      _
    $region59: #{tpu_custom_call.1} parent=1 // pred_check_branch
      %1598 = sbr.rel (0) target = $region61
    $region60: #{tpu_custom_call.1} parent=1 // pred_region
      %s1600 = ssub.s32 1536, 1536
      %1601 = vsyncadd [#allocation14], %s1600
      %s1602 = sshll.u32 [#allocation13], 4
      %s1603 = int_to_ptr.vmem [resolvable:$true] %s1602
      %1608 = dma.vmem_to_hbm [thread:$0]  %s1603, 1536, %s8, [#allocation14], 128, 128, 8
    $region61: #{tpu_custom_call.1} parent=1 // pred_fallthru
      _
    // Predicated region
    $region62: #{tpu_custom_call.1} parent=1 // pred_check
      _
    $region63: #{tpu_custom_call.1} parent=1 // pred_check_branch
      %1610 = sbr.rel (0) target = $region65
    $region64: #{tpu_custom_call.1} parent=1 // pred_region
      %1611 = dma.done [#allocation5], 1536
    $region65: #{tpu_custom_call.1} parent=1 // pred_fallthru
      _
    // Predicated region
    $region66: #{tpu_custom_call.1} parent=1 // pred_check
      _
    $region67: #{tpu_custom_call.1} parent=1 // pred_check_branch
      %1613 = sbr.rel (0) target = $region69
    $region68: #{tpu_custom_call.1} parent=1 // pred_region
      %1614 = dma.done [#allocation14], 1536
    $region69: #{tpu_custom_call.1} parent=1 // pred_fallthru
      _
    %1615 = vsyncpa [#allocation4], 1
    %1616 = vsyncpa [#allocation7], 1
    %1617 = vsyncpa [#allocation10], 1
    %1618 = vsyncpa [#allocation5], 1
    %1619 = vsyncpa [#allocation14], 1

</llo_original>
